<compile_context>
chip_gen: v7x
topology: tpu7x:2x2x1
jax: 0.10.0
libtpu: 0.0.40
codegen_flags: <defaults>
</compile_context>

<pallas_src>
import functools

import jax
import jax.numpy as jnp
from jax.experimental import pallas as pl
from jax.experimental.pallas import tpu as pltpu


# --------------------------------------------------------------------------------------
# in-kernel helpers
# --------------------------------------------------------------------------------------
def _dw5x5(pad_ref, y, w, H, W):
    """Depthwise 5x5 conv, stride 1, padding 2, on flattened (C, H*W) fp32 data.

    pad_ref : VMEM scratch (C, H*W + 2*P) used as a zero-padded staging buffer
    y       : (C, H*W) fp32 input
    w       : (C, 25) fp32 depthwise weights (BN-folded), (ky, kx) row-major
    """
    HW = H * W
    P = (pad_ref.shape[1] - HW) // 2          # left/right zero pad (>= 2*W + 2)

    # stage the input surrounded by zeros (handles rows that fall off the image)
    pad_ref[...] = jnp.zeros(pad_ref.shape, jnp.float32)
    pad_ref[:, P:P + HW] = y

    # column-validity mask depends only on dx (handles horizontal padding)
    col = jax.lax.broadcasted_iota(jnp.int32, (1, HW), 1) % W

    acc = jnp.zeros_like(y)
    for dx in range(-2, 3):
        valid = jnp.logical_and(col + dx >= 0, col + dx < W)          # (1, HW)
        part = jnp.zeros_like(y)
        for dy in range(-2, 3):
            t = (dy + 2) * 5 + (dx + 2)                               # flat tap index
            off = dy * W + dx                                         # flattened shift
            part = part + w[:, t:t + 1] * pad_ref[:, P + off:P + off + HW]
        acc = acc + jnp.where(valid, part, 0.0)
    return acc


def _ghost_bottleneck_kernel(x_ref, w1_ref, b1_ref, dw1_ref, b2_ref,
                             w3_ref, b3_ref, dw2_ref, b4_ref,
                             o_ref, pad1_ref, pad2_ref, *, H, W, cg1, cg2):
    """One batch element.  x_ref: (c1, HW); o_ref: (c2, HW); weights BN-folded."""
    x = x_ref[...]                                                    # (c1, HW)

    # ---- GhostConv 1 / cv1 : 1x1 conv + folded BN + SiLU  (MXU) ----
    y1 = jnp.dot(w1_ref[...], x, preferred_element_type=jnp.float32) + b1_ref[...]
    y1 = y1 * jax.nn.sigmoid(y1)                                      # (cg1, HW) fp32

    # ---- GhostConv 1 / cv2 : 5x5 depthwise conv + folded BN + SiLU (VPU) ----
    y2 = _dw5x5(pad1_ref, y1, dw1_ref[...], H, W) + b2_ref[...]
    y2 = y2 * jax.nn.sigmoid(y2)                                      # (cg1, HW)

    # ---- GhostConv 2 / cv1 : 1x1 conv on concat(y1, y2), done as two matmuls ----
    w3 = w3_ref[...]                                                  # (cg2, 2*cg1)
    z1 = (jnp.dot(w3[:, :cg1], y1, preferred_element_type=jnp.float32)
          + jnp.dot(w3[:, cg1:], y2, preferred_element_type=jnp.float32)
          + b3_ref[...])                                              # (cg2, HW), no act

    # ---- GhostConv 2 / cv2 : 5x5 depthwise conv + folded BN, no act ----
    z2 = _dw5x5(pad2_ref, z1, dw2_ref[...], H, W) + b4_ref[...]       # (cg2, HW)

    # ---- concat([z1, z2], channels) + identity shortcut, as two slice stores ----
    o_ref[:cg2, :] = (z1 + x[:cg2, :]).astype(o_ref.dtype)
    o_ref[cg2:, :] = (z2 + x[cg2:, :]).astype(o_ref.dtype)


# --------------------------------------------------------------------------------------
# host-side wrapper
# --------------------------------------------------------------------------------------
def _fold_bn(w, gamma, beta, mean, var, eps=1e-5):
    """Fold inference BatchNorm into the preceding (bias-free) conv."""
    scale = gamma / jnp.sqrt(var + eps)                               # (Cout,)
    w_eff = w * scale.reshape((-1,) + (1,) * (w.ndim - 1))
    b_eff = beta - mean * scale
    return w_eff, b_eff


def ghost_bottleneck(x, p):
    """x: (B, c1, H, W) NCHW.  p: dict of conv weights + BN params.  Returns (B, c2, H, W)."""
    B, c1, H, W = x.shape
    HW = H * W
    cg1 = p['w1'].shape[0]            # GhostConv1 hidden channels (= c_//2)
    cg2 = p['w3'].shape[0]            # GhostConv2 hidden channels (= c2//2)
    c_ = p['w3'].shape[1]             # = 2*cg1
    c2 = 2 * cg2
    assert c1 == c2, "s=1 GhostBottleneck identity shortcut requires c1 == c2"

    # left/right pad of the depthwise staging buffer, rounded up for aligned stores
    P = ((2 * W + 2 + 127) // 128) * 128

    # fold all four BatchNorms into conv weights/biases (inference form)
    w1e, b1e = _fold_bn(p['w1'], p['g1'], p['b1'], p['m1'], p['v1'])
    dw1e, b2e = _fold_bn(p['dw1'], p['g2'], p['b2'], p['m2'], p['v2'])
    w3e, b3e = _fold_bn(p['w3'], p['g3'], p['b3'], p['m3'], p['v3'])
    dw2e, b4e = _fold_bn(p['dw2'], p['g4'], p['b4'], p['m4'], p['v4'])

    x2 = x.reshape(B, c1, HW)
    kernel = functools.partial(_ghost_bottleneck_kernel, H=H, W=W, cg1=cg1, cg2=cg2)

    out = pl.pallas_call(
        kernel,
        out_shape=jax.ShapeDtypeStruct((B, c2, HW), x.dtype),
        grid_spec=pltpu.PrefetchScalarGridSpec(
            num_scalar_prefetch=0,
            grid=(B,),
            in_specs=[
                pl.BlockSpec((None, c1, HW), lambda b: (b, 0, 0)),    # x (one sample)
                pl.BlockSpec((cg1, c1), lambda b: (0, 0)),            # w1 (folded)
                pl.BlockSpec((cg1, 1), lambda b: (0, 0)),             # b1
                pl.BlockSpec((cg1, 25), lambda b: (0, 0)),            # dw1 (folded)
                pl.BlockSpec((cg1, 1), lambda b: (0, 0)),             # b2
                pl.BlockSpec((cg2, c_), lambda b: (0, 0)),            # w3 (folded)
                pl.BlockSpec((cg2, 1), lambda b: (0, 0)),             # b3
                pl.BlockSpec((cg2, 25), lambda b: (0, 0)),            # dw2 (folded)
                pl.BlockSpec((cg2, 1), lambda b: (0, 0)),             # b4
            ],
            out_specs=pl.BlockSpec((None, c2, HW), lambda b: (b, 0, 0)),
            scratch_shapes=[
                pltpu.VMEM((cg1, HW + 2 * P), jnp.float32),           # DW staging 1
                pltpu.VMEM((cg2, HW + 2 * P), jnp.float32),           # DW staging 2
            ],
        ),
        compiler_params=pltpu.CompilerParams(dimension_semantics=("parallel",)),
    )(
        x2,
        w1e, b1e.reshape(cg1, 1), dw1e.reshape(cg1, 25), b2e.reshape(cg1, 1),
        w3e, b3e.reshape(cg2, 1), dw2e.reshape(cg2, 25), b4e.reshape(cg2, 1),
    )
    return out.reshape(B, c2, H, W)


# --------------------------------------------------------------------------------------
# pure-JAX reference mirroring the PyTorch forward (eval-mode BN, s=1 path)
# --------------------------------------------------------------------------------------
def _reference(x, p, eps=1e-5):
    hi = jax.lax.Precision.HIGHEST

    def conv1x1(t, w):
        return jnp.einsum('oi,bihw->bohw', w, t, precision=hi)

    def dwconv5(t, w):
        C = t.shape[1]
        return jax.lax.conv_general_dilated(
            t, w[:, None, :, :], window_strides=(1, 1), padding=((2, 2), (2, 2)),
            dimension_numbers=('NCHW', 'OIHW', 'NCHW'),
            feature_group_count=C, precision=hi)

    def bn(t, g, b, m, v):
        return ((t - m[None, :, None, None]) / jnp.sqrt(v[None, :, None, None] + eps)
                * g[None, :, None, None] + b[None, :, None, None])

    def silu(t):
        return t * jax.nn.sigmoid(t)

    y1 = silu(bn(conv1x1(x, p['w1']), p['g1'], p['b1'], p['m1'], p['v1']))
    y2 = silu(bn(dwconv5(y1, p['dw1']), p['g2'], p['b2'], p['m2'], p['v2']))
    g = jnp.concatenate([y1, y2], axis=1)
    z1 = bn(conv1x1(g, p['w3']), p['g3'], p['b3'], p['m3'], p['v3'])
    z2 = bn(dwconv5(z1, p['dw2']), p['g4'], p['b4'], p['m4'], p['v4'])
    return jnp.concatenate([z1, z2], axis=1) + x


# --------------------------------------------------------------------------------------
if __name__ == "__main__":
    # GhostBottleneck(c1=8, c2=8, k=3, s=1)  ->  c_ = 4, ghost hidden = 2 / 4
    B, c1, H, W = 2, 8, 16, 16
    c2 = 8
    c_ = c2 // 2
    cg1 = c_ // 2
    cg2 = c2 // 2

    def make_conv_bn(key, cout, cin, depthwise=False):
        kw, kg, kb, km, kv = jax.random.split(key, 5)
        if depthwise:
            w = jax.random.normal(kw, (cout, 5, 5), jnp.float32) * 0.2
        else:
            w = jax.random.normal(kw, (cout, cin), jnp.float32) * 0.3
        g = 1.0 + 0.1 * jax.random.normal(kg, (cout,), jnp.float32)
        b = 0.1 * jax.random.normal(kb, (cout,), jnp.float32)
        m = 0.1 * jax.random.normal(km, (cout,), jnp.float32)
        v = 1.0 + 0.5 * jax.random.uniform(kv, (cout,), jnp.float32)
        return w, g, b, m, v

    k0, k1, k2, k3, k4 = jax.random.split(jax.random.PRNGKey(0), 5)
    x = jax.random.normal(k0, (B, c1, H, W), dtype=jnp.float32)

    p = {}
    p['w1'], p['g1'], p['b1'], p['m1'], p['v1'] = make_conv_bn(k1, cg1, c1)
    p['dw1'], p['g2'], p['b2'], p['m2'], p['v2'] = make_conv_bn(k2, cg1, None, depthwise=True)
    p['w3'], p['g3'], p['b3'], p['m3'], p['v3'] = make_conv_bn(k3, cg2, c_)
    p['dw2'], p['g4'], p['b4'], p['m4'], p['v4'] = make_conv_bn(k4, cg2, None, depthwise=True)

    out = ghost_bottleneck(x, p)
    out = jax.block_until_ready(out)

    ref = _reference(x, p)

    assert out.shape == (B, c2, H, W)
    assert jnp.allclose(out, ref, atol=1e-3, rtol=1e-3), "mismatch vs JAX reference"

    print("KERNEL_OK")
</pallas_src>

<mosaic_0001>
module attributes {stable_mosaic.version = 11 : i64} {
  func.func @_ghost_bottleneck_kernel(%arg0: i32, %arg1: memref<1x8x256xf32, #tpu.memory_space<vmem>>, %arg2: memref<2x8xf32, #tpu.memory_space<vmem>>, %arg3: memref<2x1xf32, #tpu.memory_space<vmem>>, %arg4: memref<2x25xf32, #tpu.memory_space<vmem>>, %arg5: memref<2x1xf32, #tpu.memory_space<vmem>>, %arg6: memref<4x4xf32, #tpu.memory_space<vmem>>, %arg7: memref<4x1xf32, #tpu.memory_space<vmem>>, %arg8: memref<4x25xf32, #tpu.memory_space<vmem>>, %arg9: memref<4x1xf32, #tpu.memory_space<vmem>>, %arg10: memref<1x8x256xf32, #tpu.memory_space<vmem>>, %arg11: memref<2x512xf32, #tpu.memory_space<vmem>>, %arg12: memref<4x512xf32, #tpu.memory_space<vmem>>) attributes {dimension_semantics = [#tpu.dimension_semantics<parallel>], iteration_bounds = array<i64: 2>, scalar_prefetch = 0 : i64, scratch_operands = 2 : i64, tpu.core_type = #tpu.core_type<tc>, window_params = [{transform_indices = @transform_0, window_bounds = array<i64: 1, 8, 256>}, {pipeline_mode = #tpu.pipeline_mode<synchronous>, transform_indices = @transform_1, window_bounds = array<i64: 2, 8>}, {pipeline_mode = #tpu.pipeline_mode<synchronous>, transform_indices = @transform_2, window_bounds = array<i64: 2, 1>}, {pipeline_mode = #tpu.pipeline_mode<synchronous>, transform_indices = @transform_3, window_bounds = array<i64: 2, 25>}, {pipeline_mode = #tpu.pipeline_mode<synchronous>, transform_indices = @transform_4, window_bounds = array<i64: 2, 1>}, {pipeline_mode = #tpu.pipeline_mode<synchronous>, transform_indices = @transform_5, window_bounds = array<i64: 4, 4>}, {pipeline_mode = #tpu.pipeline_mode<synchronous>, transform_indices = @transform_6, window_bounds = array<i64: 4, 1>}, {pipeline_mode = #tpu.pipeline_mode<synchronous>, transform_indices = @transform_7, window_bounds = array<i64: 4, 25>}, {pipeline_mode = #tpu.pipeline_mode<synchronous>, transform_indices = @transform_8, window_bounds = array<i64: 4, 1>}, {transform_indices = @transform_9, window_bounds = array<i64: 1, 8, 256>}]} {
    %c0 = arith.constant 0 : index
    %c0_0 = arith.constant 0 : index
    %c0_1 = arith.constant 0 : index
    %0 = vector.load %arg1[%c0, %c0_0, %c0_1] : memref<1x8x256xf32, #tpu.memory_space<vmem>>, vector<1x8x256xf32>
    %1 = vector.shape_cast %0 : vector<1x8x256xf32> to vector<8x256xf32>
    %c0_2 = arith.constant 0 : index
    %c0_3 = arith.constant 0 : index
    %2 = vector.load %arg2[%c0_2, %c0_3] : memref<2x8xf32, #tpu.memory_space<vmem>>, vector<2x8xf32>
    %cst = arith.constant dense<0.000000e+00> : vector<2x256xf32>
    %3 = tpu.matmul %2, %1, %cst {dimension_numbers = #tpu.dot_dimension_numbers<[1], [0], [0], [1], [0, 0, 1, 1], [], []>} : vector<2x8xf32>, vector<8x256xf32>, vector<2x256xf32> -> vector<2x256xf32>
    %c0_4 = arith.constant 0 : index
    %c0_5 = arith.constant 0 : index
    %4 = vector.load %arg3[%c0_4, %c0_5] : memref<2x1xf32, #tpu.memory_space<vmem>>, vector<2x1xf32>
    %5 = vector.broadcast %4 : vector<2x1xf32> to vector<2x256xf32>
    %6 = arith.addf %3, %5 : vector<2x256xf32>
    %7 = arith.negf %6 : vector<2x256xf32>
    %8 = math.exp %7 : vector<2x256xf32>
    %cst_6 = arith.constant 1.000000e+00 : f32
    %9 = vector.broadcast %cst_6 : f32 to vector<2x256xf32>
    %10 = arith.addf %9, %8 : vector<2x256xf32>
    %11 = arith.divf %9, %10 : vector<2x256xf32>
    %12 = arith.mulf %6, %11 : vector<2x256xf32>
    %c0_7 = arith.constant 0 : index
    %c0_8 = arith.constant 0 : index
    %13 = vector.load %arg4[%c0_7, %c0_8] : memref<2x25xf32, #tpu.memory_space<vmem>>, vector<2x25xf32>
    %cst_9 = arith.constant 0.000000e+00 : f32
    %14 = vector.broadcast %cst_9 : f32 to vector<2x512xf32>
    %c0_10 = arith.constant 0 : index
    %c0_11 = arith.constant 0 : index
    %15 = vector.load %arg11[%c0_10, %c0_11] : memref<2x512xf32, #tpu.memory_space<vmem>>, vector<2x512xf32>
    tpu.vector_store %arg11[%c0_10, %c0_11], %14 {strides = array<i32>} : memref<2x512xf32, #tpu.memory_space<vmem>>, vector<2x512xf32>,
    %c0_12 = arith.constant 0 : index
    %c128 = arith.constant 128 : index
    %16 = vector.load %arg11[%c0_12, %c128] : memref<2x512xf32, #tpu.memory_space<vmem>>, vector<2x256xf32>
    tpu.vector_store %arg11[%c0_12, %c128], %12 {strides = array<i32>} : memref<2x512xf32, #tpu.memory_space<vmem>>, vector<2x256xf32>,
    %17 = tpu.iota {dimensions = array<i32: 1>} : vector<1x256xi32>
    %c16_i32 = arith.constant 16 : i32
    %c0_i32 = arith.constant 0 : i32
    %18 = arith.cmpi eq, %c16_i32, %c0_i32 : i32
    %c1_i32 = arith.constant 1 : i32
    %19 = arith.select %18, %c1_i32, %c16_i32 : i32
    %20 = vector.broadcast %19 : i32 to vector<1x256xi32>
    %21 = arith.remsi %17, %20 : vector<1x256xi32>
    %c0_i32_13 = arith.constant 0 : i32
    %22 = vector.broadcast %c0_i32_13 : i32 to vector<1x256xi32>
    %23 = arith.cmpi ne, %21, %22 : vector<1x256xi32>
    %c0_i32_14 = arith.constant 0 : i32
    %24 = vector.broadcast %c0_i32_14 : i32 to vector<1x256xi32>
    %25 = arith.cmpi slt, %21, %24 : vector<1x256xi32>
    %c0_i32_15 = arith.constant 0 : i32
    %26 = arith.cmpi slt, %19, %c0_i32_15 : i32
    %27 = vector.broadcast %26 : i1 to vector<1x256xi1>
    %28 = vector.broadcast %27 : vector<1x256xi1> to vector<1x256xi1>
    %29 = arith.xori %25, %28 : vector<1x256xi1>
    %30 = arith.andi %29, %23 : vector<1x256xi1>
    %31 = vector.broadcast %19 : i32 to vector<1x256xi32>
    %32 = arith.addi %21, %31 : vector<1x256xi32>
    %33 = arith.select %30, %32, %21 : vector<1x256xi1>, vector<1x256xi32>
    %cst_16 = arith.constant 0.000000e+00 : f32
    %34 = vector.broadcast %cst_16 : f32 to vector<2x256xf32>
    %c-2_i32 = arith.constant -2 : i32
    %35 = vector.broadcast %c-2_i32 : i32 to vector<1x256xi32>
    %36 = arith.addi %33, %35 : vector<1x256xi32>
    %c0_i32_17 = arith.constant 0 : i32
    %37 = vector.broadcast %c0_i32_17 : i32 to vector<1x256xi32>
    %38 = arith.cmpi sge, %36, %37 : vector<1x256xi32>
    %c-2_i32_18 = arith.constant -2 : i32
    %39 = vector.broadcast %c-2_i32_18 : i32 to vector<1x256xi32>
    %40 = arith.addi %33, %39 : vector<1x256xi32>
    %c16_i32_19 = arith.constant 16 : i32
    %41 = vector.broadcast %c16_i32_19 : i32 to vector<1x256xi32>
    %42 = arith.cmpi slt, %40, %41 : vector<1x256xi32>
    %43 = arith.andi %38, %42 : vector<1x256xi1>
    %cst_20 = arith.constant 0.000000e+00 : f32
    %44 = vector.broadcast %cst_20 : f32 to vector<2x256xf32>
    %45 = vector.extract_strided_slice %13 {offsets = [0, 0], sizes = [2, 1], strides = [1, 1]} : vector<2x25xf32> to vector<2x1xf32>
    %c0_21 = arith.constant 0 : index
    %c94 = arith.constant 94 : index
    %46 = vector.load %arg11[%c0_21, %c94] : memref<2x512xf32, #tpu.memory_space<vmem>>, vector<2x256xf32>
    %47 = vector.broadcast %45 : vector<2x1xf32> to vector<2x256xf32>
    %48 = arith.mulf %47, %46 : vector<2x256xf32>
    %49 = arith.addf %44, %48 : vector<2x256xf32>
    %50 = vector.extract_strided_slice %13 {offsets = [0, 5], sizes = [2, 1], strides = [1, 1]} : vector<2x25xf32> to vector<2x1xf32>
    %c0_22 = arith.constant 0 : index
    %c110 = arith.constant 110 : index
    %51 = vector.load %arg11[%c0_22, %c110] : memref<2x512xf32, #tpu.memory_space<vmem>>, vector<2x256xf32>
    %52 = vector.broadcast %50 : vector<2x1xf32> to vector<2x256xf32>
    %53 = arith.mulf %52, %51 : vector<2x256xf32>
    %54 = arith.addf %49, %53 : vector<2x256xf32>
    %55 = vector.extract_strided_slice %13 {offsets = [0, 10], sizes = [2, 1], strides = [1, 1]} : vector<2x25xf32> to vector<2x1xf32>
    %c0_23 = arith.constant 0 : index
    %c126 = arith.constant 126 : index
    %56 = vector.load %arg11[%c0_23, %c126] : memref<2x512xf32, #tpu.memory_space<vmem>>, vector<2x256xf32>
    %57 = vector.broadcast %55 : vector<2x1xf32> to vector<2x256xf32>
    %58 = arith.mulf %57, %56 : vector<2x256xf32>
    %59 = arith.addf %54, %58 : vector<2x256xf32>
    %60 = vector.extract_strided_slice %13 {offsets = [0, 15], sizes = [2, 1], strides = [1, 1]} : vector<2x25xf32> to vector<2x1xf32>
    %c0_24 = arith.constant 0 : index
    %c142 = arith.constant 142 : index
    %61 = vector.load %arg11[%c0_24, %c142] : memref<2x512xf32, #tpu.memory_space<vmem>>, vector<2x256xf32>
    %62 = vector.broadcast %60 : vector<2x1xf32> to vector<2x256xf32>
    %63 = arith.mulf %62, %61 : vector<2x256xf32>
    %64 = arith.addf %59, %63 : vector<2x256xf32>
    %65 = vector.extract_strided_slice %13 {offsets = [0, 20], sizes = [2, 1], strides = [1, 1]} : vector<2x25xf32> to vector<2x1xf32>
    %c0_25 = arith.constant 0 : index
    %c158 = arith.constant 158 : index
    %66 = vector.load %arg11[%c0_25, %c158] : memref<2x512xf32, #tpu.memory_space<vmem>>, vector<2x256xf32>
    %67 = vector.broadcast %65 : vector<2x1xf32> to vector<2x256xf32>
    %68 = arith.mulf %67, %66 : vector<2x256xf32>
    %69 = arith.addf %64, %68 : vector<2x256xf32>
    %cst_26 = arith.constant 0.000000e+00 : f32
    %70 = vector.shape_cast %43 : vector<1x256xi1> to vector<1x256xi1>
    %71 = vector.broadcast %70 : vector<1x256xi1> to vector<2x256xi1>
    %72 = vector.broadcast %cst_26 : f32 to vector<2x256xf32>
    %73 = arith.select %71, %69, %72 : vector<2x256xi1>, vector<2x256xf32>
    %74 = arith.addf %34, %73 : vector<2x256xf32>
    %c-1_i32 = arith.constant -1 : i32
    %75 = vector.broadcast %c-1_i32 : i32 to vector<1x256xi32>
    %76 = arith.addi %33, %75 : vector<1x256xi32>
    %c0_i32_27 = arith.constant 0 : i32
    %77 = vector.broadcast %c0_i32_27 : i32 to vector<1x256xi32>
    %78 = arith.cmpi sge, %76, %77 : vector<1x256xi32>
    %c-1_i32_28 = arith.constant -1 : i32
    %79 = vector.broadcast %c-1_i32_28 : i32 to vector<1x256xi32>
    %80 = arith.addi %33, %79 : vector<1x256xi32>
    %c16_i32_29 = arith.constant 16 : i32
    %81 = vector.broadcast %c16_i32_29 : i32 to vector<1x256xi32>
    %82 = arith.cmpi slt, %80, %81 : vector<1x256xi32>
    %83 = arith.andi %78, %82 : vector<1x256xi1>
    %cst_30 = arith.constant 0.000000e+00 : f32
    %84 = vector.broadcast %cst_30 : f32 to vector<2x256xf32>
    %85 = vector.extract_strided_slice %13 {offsets = [0, 1], sizes = [2, 1], strides = [1, 1]} : vector<2x25xf32> to vector<2x1xf32>
    %c0_31 = arith.constant 0 : index
    %c95 = arith.constant 95 : index
    %86 = vector.load %arg11[%c0_31, %c95] : memref<2x512xf32, #tpu.memory_space<vmem>>, vector<2x256xf32>
    %87 = vector.broadcast %85 : vector<2x1xf32> to vector<2x256xf32>
    %88 = arith.mulf %87, %86 : vector<2x256xf32>
    %89 = arith.addf %84, %88 : vector<2x256xf32>
    %90 = vector.extract_strided_slice %13 {offsets = [0, 6], sizes = [2, 1], strides = [1, 1]} : vector<2x25xf32> to vector<2x1xf32>
    %c0_32 = arith.constant 0 : index
    %c111 = arith.constant 111 : index
    %91 = vector.load %arg11[%c0_32, %c111] : memref<2x512xf32, #tpu.memory_space<vmem>>, vector<2x256xf32>
    %92 = vector.broadcast %90 : vector<2x1xf32> to vector<2x256xf32>
    %93 = arith.mulf %92, %91 : vector<2x256xf32>
    %94 = arith.addf %89, %93 : vector<2x256xf32>
    %95 = vector.extract_strided_slice %13 {offsets = [0, 11], sizes = [2, 1], strides = [1, 1]} : vector<2x25xf32> to vector<2x1xf32>
    %c0_33 = arith.constant 0 : index
    %c127 = arith.constant 127 : index
    %96 = vector.load %arg11[%c0_33, %c127] : memref<2x512xf32, #tpu.memory_space<vmem>>, vector<2x256xf32>
    %97 = vector.broadcast %95 : vector<2x1xf32> to vector<2x256xf32>
    %98 = arith.mulf %97, %96 : vector<2x256xf32>
    %99 = arith.addf %94, %98 : vector<2x256xf32>
    %100 = vector.extract_strided_slice %13 {offsets = [0, 16], sizes = [2, 1], strides = [1, 1]} : vector<2x25xf32> to vector<2x1xf32>
    %c0_34 = arith.constant 0 : index
    %c143 = arith.constant 143 : index
    %101 = vector.load %arg11[%c0_34, %c143] : memref<2x512xf32, #tpu.memory_space<vmem>>, vector<2x256xf32>
    %102 = vector.broadcast %100 : vector<2x1xf32> to vector<2x256xf32>
    %103 = arith.mulf %102, %101 : vector<2x256xf32>
    %104 = arith.addf %99, %103 : vector<2x256xf32>
    %105 = vector.extract_strided_slice %13 {offsets = [0, 21], sizes = [2, 1], strides = [1, 1]} : vector<2x25xf32> to vector<2x1xf32>
    %c0_35 = arith.constant 0 : index
    %c159 = arith.constant 159 : index
    %106 = vector.load %arg11[%c0_35, %c159] : memref<2x512xf32, #tpu.memory_space<vmem>>, vector<2x256xf32>
    %107 = vector.broadcast %105 : vector<2x1xf32> to vector<2x256xf32>
    %108 = arith.mulf %107, %106 : vector<2x256xf32>
    %109 = arith.addf %104, %108 : vector<2x256xf32>
    %cst_36 = arith.constant 0.000000e+00 : f32
    %110 = vector.shape_cast %83 : vector<1x256xi1> to vector<1x256xi1>
    %111 = vector.broadcast %110 : vector<1x256xi1> to vector<2x256xi1>
    %112 = vector.broadcast %cst_36 : f32 to vector<2x256xf32>
    %113 = arith.select %111, %109, %112 : vector<2x256xi1>, vector<2x256xf32>
    %114 = arith.addf %74, %113 : vector<2x256xf32>
    %c0_i32_37 = arith.constant 0 : i32
    %115 = vector.broadcast %c0_i32_37 : i32 to vector<1x256xi32>
    %116 = arith.addi %33, %115 : vector<1x256xi32>
    %c0_i32_38 = arith.constant 0 : i32
    %117 = vector.broadcast %c0_i32_38 : i32 to vector<1x256xi32>
    %118 = arith.cmpi sge, %116, %117 : vector<1x256xi32>
    %c0_i32_39 = arith.constant 0 : i32
    %119 = vector.broadcast %c0_i32_39 : i32 to vector<1x256xi32>
    %120 = arith.addi %33, %119 : vector<1x256xi32>
    %c16_i32_40 = arith.constant 16 : i32
    %121 = vector.broadcast %c16_i32_40 : i32 to vector<1x256xi32>
    %122 = arith.cmpi slt, %120, %121 : vector<1x256xi32>
    %123 = arith.andi %118, %122 : vector<1x256xi1>
    %cst_41 = arith.constant 0.000000e+00 : f32
    %124 = vector.broadcast %cst_41 : f32 to vector<2x256xf32>
    %125 = vector.extract_strided_slice %13 {offsets = [0, 2], sizes = [2, 1], strides = [1, 1]} : vector<2x25xf32> to vector<2x1xf32>
    %c0_42 = arith.constant 0 : index
    %c96 = arith.constant 96 : index
    %126 = vector.load %arg11[%c0_42, %c96] : memref<2x512xf32, #tpu.memory_space<vmem>>, vector<2x256xf32>
    %127 = vector.broadcast %125 : vector<2x1xf32> to vector<2x256xf32>
    %128 = arith.mulf %127, %126 : vector<2x256xf32>
    %129 = arith.addf %124, %128 : vector<2x256xf32>
    %130 = vector.extract_strided_slice %13 {offsets = [0, 7], sizes = [2, 1], strides = [1, 1]} : vector<2x25xf32> to vector<2x1xf32>
    %c0_43 = arith.constant 0 : index
    %c112 = arith.constant 112 : index
    %131 = vector.load %arg11[%c0_43, %c112] : memref<2x512xf32, #tpu.memory_space<vmem>>, vector<2x256xf32>
    %132 = vector.broadcast %130 : vector<2x1xf32> to vector<2x256xf32>
    %133 = arith.mulf %132, %131 : vector<2x256xf32>
    %134 = arith.addf %129, %133 : vector<2x256xf32>
    %135 = vector.extract_strided_slice %13 {offsets = [0, 12], sizes = [2, 1], strides = [1, 1]} : vector<2x25xf32> to vector<2x1xf32>
    %c0_44 = arith.constant 0 : index
    %c128_45 = arith.constant 128 : index
    %136 = vector.load %arg11[%c0_44, %c128_45] : memref<2x512xf32, #tpu.memory_space<vmem>>, vector<2x256xf32>
    %137 = vector.broadcast %135 : vector<2x1xf32> to vector<2x256xf32>
    %138 = arith.mulf %137, %136 : vector<2x256xf32>
    %139 = arith.addf %134, %138 : vector<2x256xf32>
    %140 = vector.extract_strided_slice %13 {offsets = [0, 17], sizes = [2, 1], strides = [1, 1]} : vector<2x25xf32> to vector<2x1xf32>
    %c0_46 = arith.constant 0 : index
    %c144 = arith.constant 144 : index
    %141 = vector.load %arg11[%c0_46, %c144] : memref<2x512xf32, #tpu.memory_space<vmem>>, vector<2x256xf32>
    %142 = vector.broadcast %140 : vector<2x1xf32> to vector<2x256xf32>
    %143 = arith.mulf %142, %141 : vector<2x256xf32>
    %144 = arith.addf %139, %143 : vector<2x256xf32>
    %145 = vector.extract_strided_slice %13 {offsets = [0, 22], sizes = [2, 1], strides = [1, 1]} : vector<2x25xf32> to vector<2x1xf32>
    %c0_47 = arith.constant 0 : index
    %c160 = arith.constant 160 : index
    %146 = vector.load %arg11[%c0_47, %c160] : memref<2x512xf32, #tpu.memory_space<vmem>>, vector<2x256xf32>
    %147 = vector.broadcast %145 : vector<2x1xf32> to vector<2x256xf32>
    %148 = arith.mulf %147, %146 : vector<2x256xf32>
    %149 = arith.addf %144, %148 : vector<2x256xf32>
    %cst_48 = arith.constant 0.000000e+00 : f32
    %150 = vector.shape_cast %123 : vector<1x256xi1> to vector<1x256xi1>
    %151 = vector.broadcast %150 : vector<1x256xi1> to vector<2x256xi1>
    %152 = vector.broadcast %cst_48 : f32 to vector<2x256xf32>
    %153 = arith.select %151, %149, %152 : vector<2x256xi1>, vector<2x256xf32>
    %154 = arith.addf %114, %153 : vector<2x256xf32>
    %c1_i32_49 = arith.constant 1 : i32
    %155 = vector.broadcast %c1_i32_49 : i32 to vector<1x256xi32>
    %156 = arith.addi %33, %155 : vector<1x256xi32>
    %c0_i32_50 = arith.constant 0 : i32
    %157 = vector.broadcast %c0_i32_50 : i32 to vector<1x256xi32>
    %158 = arith.cmpi sge, %156, %157 : vector<1x256xi32>
    %c1_i32_51 = arith.constant 1 : i32
    %159 = vector.broadcast %c1_i32_51 : i32 to vector<1x256xi32>
    %160 = arith.addi %33, %159 : vector<1x256xi32>
    %c16_i32_52 = arith.constant 16 : i32
    %161 = vector.broadcast %c16_i32_52 : i32 to vector<1x256xi32>
    %162 = arith.cmpi slt, %160, %161 : vector<1x256xi32>
    %163 = arith.andi %158, %162 : vector<1x256xi1>
    %cst_53 = arith.constant 0.000000e+00 : f32
    %164 = vector.broadcast %cst_53 : f32 to vector<2x256xf32>
    %165 = vector.extract_strided_slice %13 {offsets = [0, 3], sizes = [2, 1], strides = [1, 1]} : vector<2x25xf32> to vector<2x1xf32>
    %c0_54 = arith.constant 0 : index
    %c97 = arith.constant 97 : index
    %166 = vector.load %arg11[%c0_54, %c97] : memref<2x512xf32, #tpu.memory_space<vmem>>, vector<2x256xf32>
    %167 = vector.broadcast %165 : vector<2x1xf32> to vector<2x256xf32>
    %168 = arith.mulf %167, %166 : vector<2x256xf32>
    %169 = arith.addf %164, %168 : vector<2x256xf32>
    %170 = vector.extract_strided_slice %13 {offsets = [0, 8], sizes = [2, 1], strides = [1, 1]} : vector<2x25xf32> to vector<2x1xf32>
    %c0_55 = arith.constant 0 : index
    %c113 = arith.constant 113 : index
    %171 = vector.load %arg11[%c0_55, %c113] : memref<2x512xf32, #tpu.memory_space<vmem>>, vector<2x256xf32>
    %172 = vector.broadcast %170 : vector<2x1xf32> to vector<2x256xf32>
    %173 = arith.mulf %172, %171 : vector<2x256xf32>
    %174 = arith.addf %169, %173 : vector<2x256xf32>
    %175 = vector.extract_strided_slice %13 {offsets = [0, 13], sizes = [2, 1], strides = [1, 1]} : vector<2x25xf32> to vector<2x1xf32>
    %c0_56 = arith.constant 0 : index
    %c129 = arith.constant 129 : index
    %176 = vector.load %arg11[%c0_56, %c129] : memref<2x512xf32, #tpu.memory_space<vmem>>, vector<2x256xf32>
    %177 = vector.broadcast %175 : vector<2x1xf32> to vector<2x256xf32>
    %178 = arith.mulf %177, %176 : vector<2x256xf32>
    %179 = arith.addf %174, %178 : vector<2x256xf32>
    %180 = vector.extract_strided_slice %13 {offsets = [0, 18], sizes = [2, 1], strides = [1, 1]} : vector<2x25xf32> to vector<2x1xf32>
    %c0_57 = arith.constant 0 : index
    %c145 = arith.constant 145 : index
    %181 = vector.load %arg11[%c0_57, %c145] : memref<2x512xf32, #tpu.memory_space<vmem>>, vector<2x256xf32>
    %182 = vector.broadcast %180 : vector<2x1xf32> to vector<2x256xf32>
    %183 = arith.mulf %182, %181 : vector<2x256xf32>
    %184 = arith.addf %179, %183 : vector<2x256xf32>
    %185 = vector.extract_strided_slice %13 {offsets = [0, 23], sizes = [2, 1], strides = [1, 1]} : vector<2x25xf32> to vector<2x1xf32>
    %c0_58 = arith.constant 0 : index
    %c161 = arith.constant 161 : index
    %186 = vector.load %arg11[%c0_58, %c161] : memref<2x512xf32, #tpu.memory_space<vmem>>, vector<2x256xf32>
    %187 = vector.broadcast %185 : vector<2x1xf32> to vector<2x256xf32>
    %188 = arith.mulf %187, %186 : vector<2x256xf32>
    %189 = arith.addf %184, %188 : vector<2x256xf32>
    %cst_59 = arith.constant 0.000000e+00 : f32
    %190 = vector.shape_cast %163 : vector<1x256xi1> to vector<1x256xi1>
    %191 = vector.broadcast %190 : vector<1x256xi1> to vector<2x256xi1>
    %192 = vector.broadcast %cst_59 : f32 to vector<2x256xf32>
    %193 = arith.select %191, %189, %192 : vector<2x256xi1>, vector<2x256xf32>
    %194 = arith.addf %154, %193 : vector<2x256xf32>
    %c2_i32 = arith.constant 2 : i32
    %195 = vector.broadcast %c2_i32 : i32 to vector<1x256xi32>
    %196 = arith.addi %33, %195 : vector<1x256xi32>
    %c0_i32_60 = arith.constant 0 : i32
    %197 = vector.broadcast %c0_i32_60 : i32 to vector<1x256xi32>
    %198 = arith.cmpi sge, %196, %197 : vector<1x256xi32>
    %c2_i32_61 = arith.constant 2 : i32
    %199 = vector.broadcast %c2_i32_61 : i32 to vector<1x256xi32>
    %200 = arith.addi %33, %199 : vector<1x256xi32>
    %c16_i32_62 = arith.constant 16 : i32
    %201 = vector.broadcast %c16_i32_62 : i32 to vector<1x256xi32>
    %202 = arith.cmpi slt, %200, %201 : vector<1x256xi32>
    %203 = arith.andi %198, %202 : vector<1x256xi1>
    %cst_63 = arith.constant 0.000000e+00 : f32
    %204 = vector.broadcast %cst_63 : f32 to vector<2x256xf32>
    %205 = vector.extract_strided_slice %13 {offsets = [0, 4], sizes = [2, 1], strides = [1, 1]} : vector<2x25xf32> to vector<2x1xf32>
    %c0_64 = arith.constant 0 : index
    %c98 = arith.constant 98 : index
    %206 = vector.load %arg11[%c0_64, %c98] : memref<2x512xf32, #tpu.memory_space<vmem>>, vector<2x256xf32>
    %207 = vector.broadcast %205 : vector<2x1xf32> to vector<2x256xf32>
    %208 = arith.mulf %207, %206 : vector<2x256xf32>
    %209 = arith.addf %204, %208 : vector<2x256xf32>
    %210 = vector.extract_strided_slice %13 {offsets = [0, 9], sizes = [2, 1], strides = [1, 1]} : vector<2x25xf32> to vector<2x1xf32>
    %c0_65 = arith.constant 0 : index
    %c114 = arith.constant 114 : index
    %211 = vector.load %arg11[%c0_65, %c114] : memref<2x512xf32, #tpu.memory_space<vmem>>, vector<2x256xf32>
    %212 = vector.broadcast %210 : vector<2x1xf32> to vector<2x256xf32>
    %213 = arith.mulf %212, %211 : vector<2x256xf32>
    %214 = arith.addf %209, %213 : vector<2x256xf32>
    %215 = vector.extract_strided_slice %13 {offsets = [0, 14], sizes = [2, 1], strides = [1, 1]} : vector<2x25xf32> to vector<2x1xf32>
    %c0_66 = arith.constant 0 : index
    %c130 = arith.constant 130 : index
    %216 = vector.load %arg11[%c0_66, %c130] : memref<2x512xf32, #tpu.memory_space<vmem>>, vector<2x256xf32>
    %217 = vector.broadcast %215 : vector<2x1xf32> to vector<2x256xf32>
    %218 = arith.mulf %217, %216 : vector<2x256xf32>
    %219 = arith.addf %214, %218 : vector<2x256xf32>
    %220 = vector.extract_strided_slice %13 {offsets = [0, 19], sizes = [2, 1], strides = [1, 1]} : vector<2x25xf32> to vector<2x1xf32>
    %c0_67 = arith.constant 0 : index
    %c146 = arith.constant 146 : index
    %221 = vector.load %arg11[%c0_67, %c146] : memref<2x512xf32, #tpu.memory_space<vmem>>, vector<2x256xf32>
    %222 = vector.broadcast %220 : vector<2x1xf32> to vector<2x256xf32>
    %223 = arith.mulf %222, %221 : vector<2x256xf32>
    %224 = arith.addf %219, %223 : vector<2x256xf32>
    %225 = vector.extract_strided_slice %13 {offsets = [0, 24], sizes = [2, 1], strides = [1, 1]} : vector<2x25xf32> to vector<2x1xf32>
    %c0_68 = arith.constant 0 : index
    %c162 = arith.constant 162 : index
    %226 = vector.load %arg11[%c0_68, %c162] : memref<2x512xf32, #tpu.memory_space<vmem>>, vector<2x256xf32>
    %227 = vector.broadcast %225 : vector<2x1xf32> to vector<2x256xf32>
    %228 = arith.mulf %227, %226 : vector<2x256xf32>
    %229 = arith.addf %224, %228 : vector<2x256xf32>
    %cst_69 = arith.constant 0.000000e+00 : f32
    %230 = vector.shape_cast %203 : vector<1x256xi1> to vector<1x256xi1>
    %231 = vector.broadcast %230 : vector<1x256xi1> to vector<2x256xi1>
    %232 = vector.broadcast %cst_69 : f32 to vector<2x256xf32>
    %233 = arith.select %231, %229, %232 : vector<2x256xi1>, vector<2x256xf32>
    %234 = arith.addf %194, %233 : vector<2x256xf32>
    %c0_70 = arith.constant 0 : index
    %c0_71 = arith.constant 0 : index
    %235 = vector.load %arg5[%c0_70, %c0_71] : memref<2x1xf32, #tpu.memory_space<vmem>>, vector<2x1xf32>
    %236 = vector.broadcast %235 : vector<2x1xf32> to vector<2x256xf32>
    %237 = arith.addf %234, %236 : vector<2x256xf32>
    %238 = arith.negf %237 : vector<2x256xf32>
    %239 = math.exp %238 : vector<2x256xf32>
    %cst_72 = arith.constant 1.000000e+00 : f32
    %240 = vector.broadcast %cst_72 : f32 to vector<2x256xf32>
    %241 = arith.addf %240, %239 : vector<2x256xf32>
    %242 = arith.divf %240, %241 : vector<2x256xf32>
    %243 = arith.mulf %237, %242 : vector<2x256xf32>
    %c0_73 = arith.constant 0 : index
    %c0_74 = arith.constant 0 : index
    %244 = vector.load %arg6[%c0_73, %c0_74] : memref<4x4xf32, #tpu.memory_space<vmem>>, vector<4x4xf32>
    %245 = vector.extract_strided_slice %244 {offsets = [0, 0], sizes = [4, 2], strides = [1, 1]} : vector<4x4xf32> to vector<4x2xf32>
    %cst_75 = arith.constant dense<0.000000e+00> : vector<4x256xf32>
    %246 = tpu.matmul %245, %12, %cst_75 {dimension_numbers = #tpu.dot_dimension_numbers<[1], [0], [0], [1], [0, 0, 1, 1], [], []>} : vector<4x2xf32>, vector<2x256xf32>, vector<4x256xf32> -> vector<4x256xf32>
    %247 = vector.extract_strided_slice %244 {offsets = [0, 2], sizes = [4, 2], strides = [1, 1]} : vector<4x4xf32> to vector<4x2xf32>
    %cst_76 = arith.constant dense<0.000000e+00> : vector<4x256xf32>
    %248 = tpu.matmul %247, %243, %cst_76 {dimension_numbers = #tpu.dot_dimension_numbers<[1], [0], [0], [1], [0, 0, 1, 1], [], []>} : vector<4x2xf32>, vector<2x256xf32>, vector<4x256xf32> -> vector<4x256xf32>
    %249 = arith.addf %246, %248 : vector<4x256xf32>
    %c0_77 = arith.constant 0 : index
    %c0_78 = arith.constant 0 : index
    %250 = vector.load %arg7[%c0_77, %c0_78] : memref<4x1xf32, #tpu.memory_space<vmem>>, vector<4x1xf32>
    %251 = vector.broadcast %250 : vector<4x1xf32> to vector<4x256xf32>
    %252 = arith.addf %249, %251 : vector<4x256xf32>
    %c0_79 = arith.constant 0 : index
    %c0_80 = arith.constant 0 : index
    %253 = vector.load %arg8[%c0_79, %c0_80] : memref<4x25xf32, #tpu.memory_space<vmem>>, vector<4x25xf32>
    %cst_81 = arith.constant 0.000000e+00 : f32
    %254 = vector.broadcast %cst_81 : f32 to vector<4x512xf32>
    %c0_82 = arith.constant 0 : index
    %c0_83 = arith.constant 0 : index
    %255 = vector.load %arg12[%c0_82, %c0_83] : memref<4x512xf32, #tpu.memory_space<vmem>>, vector<4x512xf32>
    tpu.vector_store %arg12[%c0_82, %c0_83], %254 {strides = array<i32>} : memref<4x512xf32, #tpu.memory_space<vmem>>, vector<4x512xf32>,
    %c0_84 = arith.constant 0 : index
    %c128_85 = arith.constant 128 : index
    %256 = vector.load %arg12[%c0_84, %c128_85] : memref<4x512xf32, #tpu.memory_space<vmem>>, vector<4x256xf32>
    tpu.vector_store %arg12[%c0_84, %c128_85], %252 {strides = array<i32>} : memref<4x512xf32, #tpu.memory_space<vmem>>, vector<4x256xf32>,
    %257 = tpu.iota {dimensions = array<i32: 1>} : vector<1x256xi32>
    %c16_i32_86 = arith.constant 16 : i32
    %c0_i32_87 = arith.constant 0 : i32
    %258 = arith.cmpi eq, %c16_i32_86, %c0_i32_87 : i32
    %c1_i32_88 = arith.constant 1 : i32
    %259 = arith.select %258, %c1_i32_88, %c16_i32_86 : i32
    %260 = vector.broadcast %259 : i32 to vector<1x256xi32>
    %261 = arith.remsi %257, %260 : vector<1x256xi32>
    %c0_i32_89 = arith.constant 0 : i32
    %262 = vector.broadcast %c0_i32_89 : i32 to vector<1x256xi32>
    %263 = arith.cmpi ne, %261, %262 : vector<1x256xi32>
    %c0_i32_90 = arith.constant 0 : i32
    %264 = vector.broadcast %c0_i32_90 : i32 to vector<1x256xi32>
    %265 = arith.cmpi slt, %261, %264 : vector<1x256xi32>
    %c0_i32_91 = arith.constant 0 : i32
    %266 = arith.cmpi slt, %259, %c0_i32_91 : i32
    %267 = vector.broadcast %266 : i1 to vector<1x256xi1>
    %268 = vector.broadcast %267 : vector<1x256xi1> to vector<1x256xi1>
    %269 = arith.xori %265, %268 : vector<1x256xi1>
    %270 = arith.andi %269, %263 : vector<1x256xi1>
    %271 = vector.broadcast %259 : i32 to vector<1x256xi32>
    %272 = arith.addi %261, %271 : vector<1x256xi32>
    %273 = arith.select %270, %272, %261 : vector<1x256xi1>, vector<1x256xi32>
    %cst_92 = arith.constant 0.000000e+00 : f32
    %274 = vector.broadcast %cst_92 : f32 to vector<4x256xf32>
    %c-2_i32_93 = arith.constant -2 : i32
    %275 = vector.broadcast %c-2_i32_93 : i32 to vector<1x256xi32>
    %276 = arith.addi %273, %275 : vector<1x256xi32>
    %c0_i32_94 = arith.constant 0 : i32
    %277 = vector.broadcast %c0_i32_94 : i32 to vector<1x256xi32>
    %278 = arith.cmpi sge, %276, %277 : vector<1x256xi32>
    %c-2_i32_95 = arith.constant -2 : i32
    %279 = vector.broadcast %c-2_i32_95 : i32 to vector<1x256xi32>
    %280 = arith.addi %273, %279 : vector<1x256xi32>
    %c16_i32_96 = arith.constant 16 : i32
    %281 = vector.broadcast %c16_i32_96 : i32 to vector<1x256xi32>
    %282 = arith.cmpi slt, %280, %281 : vector<1x256xi32>
    %283 = arith.andi %278, %282 : vector<1x256xi1>
    %cst_97 = arith.constant 0.000000e+00 : f32
    %284 = vector.broadcast %cst_97 : f32 to vector<4x256xf32>
    %285 = vector.extract_strided_slice %253 {offsets = [0, 0], sizes = [4, 1], strides = [1, 1]} : vector<4x25xf32> to vector<4x1xf32>
    %c0_98 = arith.constant 0 : index
    %c94_99 = arith.constant 94 : index
    %286 = vector.load %arg12[%c0_98, %c94_99] : memref<4x512xf32, #tpu.memory_space<vmem>>, vector<4x256xf32>
    %287 = vector.broadcast %285 : vector<4x1xf32> to vector<4x256xf32>
    %288 = arith.mulf %287, %286 : vector<4x256xf32>
    %289 = arith.addf %284, %288 : vector<4x256xf32>
    %290 = vector.extract_strided_slice %253 {offsets = [0, 5], sizes = [4, 1], strides = [1, 1]} : vector<4x25xf32> to vector<4x1xf32>
    %c0_100 = arith.constant 0 : index
    %c110_101 = arith.constant 110 : index
    %291 = vector.load %arg12[%c0_100, %c110_101] : memref<4x512xf32, #tpu.memory_space<vmem>>, vector<4x256xf32>
    %292 = vector.broadcast %290 : vector<4x1xf32> to vector<4x256xf32>
    %293 = arith.mulf %292, %291 : vector<4x256xf32>
    %294 = arith.addf %289, %293 : vector<4x256xf32>
    %295 = vector.extract_strided_slice %253 {offsets = [0, 10], sizes = [4, 1], strides = [1, 1]} : vector<4x25xf32> to vector<4x1xf32>
    %c0_102 = arith.constant 0 : index
    %c126_103 = arith.constant 126 : index
    %296 = vector.load %arg12[%c0_102, %c126_103] : memref<4x512xf32, #tpu.memory_space<vmem>>, vector<4x256xf32>
    %297 = vector.broadcast %295 : vector<4x1xf32> to vector<4x256xf32>
    %298 = arith.mulf %297, %296 : vector<4x256xf32>
    %299 = arith.addf %294, %298 : vector<4x256xf32>
    %300 = vector.extract_strided_slice %253 {offsets = [0, 15], sizes = [4, 1], strides = [1, 1]} : vector<4x25xf32> to vector<4x1xf32>
    %c0_104 = arith.constant 0 : index
    %c142_105 = arith.constant 142 : index
    %301 = vector.load %arg12[%c0_104, %c142_105] : memref<4x512xf32, #tpu.memory_space<vmem>>, vector<4x256xf32>
    %302 = vector.broadcast %300 : vector<4x1xf32> to vector<4x256xf32>
    %303 = arith.mulf %302, %301 : vector<4x256xf32>
    %304 = arith.addf %299, %303 : vector<4x256xf32>
    %305 = vector.extract_strided_slice %253 {offsets = [0, 20], sizes = [4, 1], strides = [1, 1]} : vector<4x25xf32> to vector<4x1xf32>
    %c0_106 = arith.constant 0 : index
    %c158_107 = arith.constant 158 : index
    %306 = vector.load %arg12[%c0_106, %c158_107] : memref<4x512xf32, #tpu.memory_space<vmem>>, vector<4x256xf32>
    %307 = vector.broadcast %305 : vector<4x1xf32> to vector<4x256xf32>
    %308 = arith.mulf %307, %306 : vector<4x256xf32>
    %309 = arith.addf %304, %308 : vector<4x256xf32>
    %cst_108 = arith.constant 0.000000e+00 : f32
    %310 = vector.shape_cast %283 : vector<1x256xi1> to vector<1x256xi1>
    %311 = vector.broadcast %310 : vector<1x256xi1> to vector<4x256xi1>
    %312 = vector.broadcast %cst_108 : f32 to vector<4x256xf32>
    %313 = arith.select %311, %309, %312 : vector<4x256xi1>, vector<4x256xf32>
    %314 = arith.addf %274, %313 : vector<4x256xf32>
    %c-1_i32_109 = arith.constant -1 : i32
    %315 = vector.broadcast %c-1_i32_109 : i32 to vector<1x256xi32>
    %316 = arith.addi %273, %315 : vector<1x256xi32>
    %c0_i32_110 = arith.constant 0 : i32
    %317 = vector.broadcast %c0_i32_110 : i32 to vector<1x256xi32>
    %318 = arith.cmpi sge, %316, %317 : vector<1x256xi32>
    %c-1_i32_111 = arith.constant -1 : i32
    %319 = vector.broadcast %c-1_i32_111 : i32 to vector<1x256xi32>
    %320 = arith.addi %273, %319 : vector<1x256xi32>
    %c16_i32_112 = arith.constant 16 : i32
    %321 = vector.broadcast %c16_i32_112 : i32 to vector<1x256xi32>
    %322 = arith.cmpi slt, %320, %321 : vector<1x256xi32>
    %323 = arith.andi %318, %322 : vector<1x256xi1>
    %cst_113 = arith.constant 0.000000e+00 : f32
    %324 = vector.broadcast %cst_113 : f32 to vector<4x256xf32>
    %325 = vector.extract_strided_slice %253 {offsets = [0, 1], sizes = [4, 1], strides = [1, 1]} : vector<4x25xf32> to vector<4x1xf32>
    %c0_114 = arith.constant 0 : index
    %c95_115 = arith.constant 95 : index
    %326 = vector.load %arg12[%c0_114, %c95_115] : memref<4x512xf32, #tpu.memory_space<vmem>>, vector<4x256xf32>
    %327 = vector.broadcast %325 : vector<4x1xf32> to vector<4x256xf32>
    %328 = arith.mulf %327, %326 : vector<4x256xf32>
    %329 = arith.addf %324, %328 : vector<4x256xf32>
    %330 = vector.extract_strided_slice %253 {offsets = [0, 6], sizes = [4, 1], strides = [1, 1]} : vector<4x25xf32> to vector<4x1xf32>
    %c0_116 = arith.constant 0 : index
    %c111_117 = arith.constant 111 : index
    %331 = vector.load %arg12[%c0_116, %c111_117] : memref<4x512xf32, #tpu.memory_space<vmem>>, vector<4x256xf32>
    %332 = vector.broadcast %330 : vector<4x1xf32> to vector<4x256xf32>
    %333 = arith.mulf %332, %331 : vector<4x256xf32>
    %334 = arith.addf %329, %333 : vector<4x256xf32>
    %335 = vector.extract_strided_slice %253 {offsets = [0, 11], sizes = [4, 1], strides = [1, 1]} : vector<4x25xf32> to vector<4x1xf32>
    %c0_118 = arith.constant 0 : index
    %c127_119 = arith.constant 127 : index
    %336 = vector.load %arg12[%c0_118, %c127_119] : memref<4x512xf32, #tpu.memory_space<vmem>>, vector<4x256xf32>
    %337 = vector.broadcast %335 : vector<4x1xf32> to vector<4x256xf32>
    %338 = arith.mulf %337, %336 : vector<4x256xf32>
    %339 = arith.addf %334, %338 : vector<4x256xf32>
    %340 = vector.extract_strided_slice %253 {offsets = [0, 16], sizes = [4, 1], strides = [1, 1]} : vector<4x25xf32> to vector<4x1xf32>
    %c0_120 = arith.constant 0 : index
    %c143_121 = arith.constant 143 : index
    %341 = vector.load %arg12[%c0_120, %c143_121] : memref<4x512xf32, #tpu.memory_space<vmem>>, vector<4x256xf32>
    %342 = vector.broadcast %340 : vector<4x1xf32> to vector<4x256xf32>
    %343 = arith.mulf %342, %341 : vector<4x256xf32>
    %344 = arith.addf %339, %343 : vector<4x256xf32>
    %345 = vector.extract_strided_slice %253 {offsets = [0, 21], sizes = [4, 1], strides = [1, 1]} : vector<4x25xf32> to vector<4x1xf32>
    %c0_122 = arith.constant 0 : index
    %c159_123 = arith.constant 159 : index
    %346 = vector.load %arg12[%c0_122, %c159_123] : memref<4x512xf32, #tpu.memory_space<vmem>>, vector<4x256xf32>
    %347 = vector.broadcast %345 : vector<4x1xf32> to vector<4x256xf32>
    %348 = arith.mulf %347, %346 : vector<4x256xf32>
    %349 = arith.addf %344, %348 : vector<4x256xf32>
    %cst_124 = arith.constant 0.000000e+00 : f32
    %350 = vector.shape_cast %323 : vector<1x256xi1> to vector<1x256xi1>
    %351 = vector.broadcast %350 : vector<1x256xi1> to vector<4x256xi1>
    %352 = vector.broadcast %cst_124 : f32 to vector<4x256xf32>
    %353 = arith.select %351, %349, %352 : vector<4x256xi1>, vector<4x256xf32>
    %354 = arith.addf %314, %353 : vector<4x256xf32>
    %c0_i32_125 = arith.constant 0 : i32
    %355 = vector.broadcast %c0_i32_125 : i32 to vector<1x256xi32>
    %356 = arith.addi %273, %355 : vector<1x256xi32>
    %c0_i32_126 = arith.constant 0 : i32
    %357 = vector.broadcast %c0_i32_126 : i32 to vector<1x256xi32>
    %358 = arith.cmpi sge, %356, %357 : vector<1x256xi32>
    %c0_i32_127 = arith.constant 0 : i32
    %359 = vector.broadcast %c0_i32_127 : i32 to vector<1x256xi32>
    %360 = arith.addi %273, %359 : vector<1x256xi32>
    %c16_i32_128 = arith.constant 16 : i32
    %361 = vector.broadcast %c16_i32_128 : i32 to vector<1x256xi32>
    %362 = arith.cmpi slt, %360, %361 : vector<1x256xi32>
    %363 = arith.andi %358, %362 : vector<1x256xi1>
    %cst_129 = arith.constant 0.000000e+00 : f32
    %364 = vector.broadcast %cst_129 : f32 to vector<4x256xf32>
    %365 = vector.extract_strided_slice %253 {offsets = [0, 2], sizes = [4, 1], strides = [1, 1]} : vector<4x25xf32> to vector<4x1xf32>
    %c0_130 = arith.constant 0 : index
    %c96_131 = arith.constant 96 : index
    %366 = vector.load %arg12[%c0_130, %c96_131] : memref<4x512xf32, #tpu.memory_space<vmem>>, vector<4x256xf32>
    %367 = vector.broadcast %365 : vector<4x1xf32> to vector<4x256xf32>
    %368 = arith.mulf %367, %366 : vector<4x256xf32>
    %369 = arith.addf %364, %368 : vector<4x256xf32>
    %370 = vector.extract_strided_slice %253 {offsets = [0, 7], sizes = [4, 1], strides = [1, 1]} : vector<4x25xf32> to vector<4x1xf32>
    %c0_132 = arith.constant 0 : index
    %c112_133 = arith.constant 112 : index
    %371 = vector.load %arg12[%c0_132, %c112_133] : memref<4x512xf32, #tpu.memory_space<vmem>>, vector<4x256xf32>
    %372 = vector.broadcast %370 : vector<4x1xf32> to vector<4x256xf32>
    %373 = arith.mulf %372, %371 : vector<4x256xf32>
    %374 = arith.addf %369, %373 : vector<4x256xf32>
    %375 = vector.extract_strided_slice %253 {offsets = [0, 12], sizes = [4, 1], strides = [1, 1]} : vector<4x25xf32> to vector<4x1xf32>
    %c0_134 = arith.constant 0 : index
    %c128_135 = arith.constant 128 : index
    %376 = vector.load %arg12[%c0_134, %c128_135] : memref<4x512xf32, #tpu.memory_space<vmem>>, vector<4x256xf32>
    %377 = vector.broadcast %375 : vector<4x1xf32> to vector<4x256xf32>
    %378 = arith.mulf %377, %376 : vector<4x256xf32>
    %379 = arith.addf %374, %378 : vector<4x256xf32>
    %380 = vector.extract_strided_slice %253 {offsets = [0, 17], sizes = [4, 1], strides = [1, 1]} : vector<4x25xf32> to vector<4x1xf32>
    %c0_136 = arith.constant 0 : index
    %c144_137 = arith.constant 144 : index
    %381 = vector.load %arg12[%c0_136, %c144_137] : memref<4x512xf32, #tpu.memory_space<vmem>>, vector<4x256xf32>
    %382 = vector.broadcast %380 : vector<4x1xf32> to vector<4x256xf32>
    %383 = arith.mulf %382, %381 : vector<4x256xf32>
    %384 = arith.addf %379, %383 : vector<4x256xf32>
    %385 = vector.extract_strided_slice %253 {offsets = [0, 22], sizes = [4, 1], strides = [1, 1]} : vector<4x25xf32> to vector<4x1xf32>
    %c0_138 = arith.constant 0 : index
    %c160_139 = arith.constant 160 : index
    %386 = vector.load %arg12[%c0_138, %c160_139] : memref<4x512xf32, #tpu.memory_space<vmem>>, vector<4x256xf32>
    %387 = vector.broadcast %385 : vector<4x1xf32> to vector<4x256xf32>
    %388 = arith.mulf %387, %386 : vector<4x256xf32>
    %389 = arith.addf %384, %388 : vector<4x256xf32>
    %cst_140 = arith.constant 0.000000e+00 : f32
    %390 = vector.shape_cast %363 : vector<1x256xi1> to vector<1x256xi1>
    %391 = vector.broadcast %390 : vector<1x256xi1> to vector<4x256xi1>
    %392 = vector.broadcast %cst_140 : f32 to vector<4x256xf32>
    %393 = arith.select %391, %389, %392 : vector<4x256xi1>, vector<4x256xf32>
    %394 = arith.addf %354, %393 : vector<4x256xf32>
    %c1_i32_141 = arith.constant 1 : i32
    %395 = vector.broadcast %c1_i32_141 : i32 to vector<1x256xi32>
    %396 = arith.addi %273, %395 : vector<1x256xi32>
    %c0_i32_142 = arith.constant 0 : i32
    %397 = vector.broadcast %c0_i32_142 : i32 to vector<1x256xi32>
    %398 = arith.cmpi sge, %396, %397 : vector<1x256xi32>
    %c1_i32_143 = arith.constant 1 : i32
    %399 = vector.broadcast %c1_i32_143 : i32 to vector<1x256xi32>
    %400 = arith.addi %273, %399 : vector<1x256xi32>
    %c16_i32_144 = arith.constant 16 : i32
    %401 = vector.broadcast %c16_i32_144 : i32 to vector<1x256xi32>
    %402 = arith.cmpi slt, %400, %401 : vector<1x256xi32>
    %403 = arith.andi %398, %402 : vector<1x256xi1>
    %cst_145 = arith.constant 0.000000e+00 : f32
    %404 = vector.broadcast %cst_145 : f32 to vector<4x256xf32>
    %405 = vector.extract_strided_slice %253 {offsets = [0, 3], sizes = [4, 1], strides = [1, 1]} : vector<4x25xf32> to vector<4x1xf32>
    %c0_146 = arith.constant 0 : index
    %c97_147 = arith.constant 97 : index
    %406 = vector.load %arg12[%c0_146, %c97_147] : memref<4x512xf32, #tpu.memory_space<vmem>>, vector<4x256xf32>
    %407 = vector.broadcast %405 : vector<4x1xf32> to vector<4x256xf32>
    %408 = arith.mulf %407, %406 : vector<4x256xf32>
    %409 = arith.addf %404, %408 : vector<4x256xf32>
    %410 = vector.extract_strided_slice %253 {offsets = [0, 8], sizes = [4, 1], strides = [1, 1]} : vector<4x25xf32> to vector<4x1xf32>
    %c0_148 = arith.constant 0 : index
    %c113_149 = arith.constant 113 : index
    %411 = vector.load %arg12[%c0_148, %c113_149] : memref<4x512xf32, #tpu.memory_space<vmem>>, vector<4x256xf32>
    %412 = vector.broadcast %410 : vector<4x1xf32> to vector<4x256xf32>
    %413 = arith.mulf %412, %411 : vector<4x256xf32>
    %414 = arith.addf %409, %413 : vector<4x256xf32>
    %415 = vector.extract_strided_slice %253 {offsets = [0, 13], sizes = [4, 1], strides = [1, 1]} : vector<4x25xf32> to vector<4x1xf32>
    %c0_150 = arith.constant 0 : index
    %c129_151 = arith.constant 129 : index
    %416 = vector.load %arg12[%c0_150, %c129_151] : memref<4x512xf32, #tpu.memory_space<vmem>>, vector<4x256xf32>
    %417 = vector.broadcast %415 : vector<4x1xf32> to vector<4x256xf32>
    %418 = arith.mulf %417, %416 : vector<4x256xf32>
    %419 = arith.addf %414, %418 : vector<4x256xf32>
    %420 = vector.extract_strided_slice %253 {offsets = [0, 18], sizes = [4, 1], strides = [1, 1]} : vector<4x25xf32> to vector<4x1xf32>
    %c0_152 = arith.constant 0 : index
    %c145_153 = arith.constant 145 : index
    %421 = vector.load %arg12[%c0_152, %c145_153] : memref<4x512xf32, #tpu.memory_space<vmem>>, vector<4x256xf32>
    %422 = vector.broadcast %420 : vector<4x1xf32> to vector<4x256xf32>
    %423 = arith.mulf %422, %421 : vector<4x256xf32>
    %424 = arith.addf %419, %423 : vector<4x256xf32>
    %425 = vector.extract_strided_slice %253 {offsets = [0, 23], sizes = [4, 1], strides = [1, 1]} : vector<4x25xf32> to vector<4x1xf32>
    %c0_154 = arith.constant 0 : index
    %c161_155 = arith.constant 161 : index
    %426 = vector.load %arg12[%c0_154, %c161_155] : memref<4x512xf32, #tpu.memory_space<vmem>>, vector<4x256xf32>
    %427 = vector.broadcast %425 : vector<4x1xf32> to vector<4x256xf32>
    %428 = arith.mulf %427, %426 : vector<4x256xf32>
    %429 = arith.addf %424, %428 : vector<4x256xf32>
    %cst_156 = arith.constant 0.000000e+00 : f32
    %430 = vector.shape_cast %403 : vector<1x256xi1> to vector<1x256xi1>
    %431 = vector.broadcast %430 : vector<1x256xi1> to vector<4x256xi1>
    %432 = vector.broadcast %cst_156 : f32 to vector<4x256xf32>
    %433 = arith.select %431, %429, %432 : vector<4x256xi1>, vector<4x256xf32>
    %434 = arith.addf %394, %433 : vector<4x256xf32>
    %c2_i32_157 = arith.constant 2 : i32
    %435 = vector.broadcast %c2_i32_157 : i32 to vector<1x256xi32>
    %436 = arith.addi %273, %435 : vector<1x256xi32>
    %c0_i32_158 = arith.constant 0 : i32
    %437 = vector.broadcast %c0_i32_158 : i32 to vector<1x256xi32>
    %438 = arith.cmpi sge, %436, %437 : vector<1x256xi32>
    %c2_i32_159 = arith.constant 2 : i32
    %439 = vector.broadcast %c2_i32_159 : i32 to vector<1x256xi32>
    %440 = arith.addi %273, %439 : vector<1x256xi32>
    %c16_i32_160 = arith.constant 16 : i32
    %441 = vector.broadcast %c16_i32_160 : i32 to vector<1x256xi32>
    %442 = arith.cmpi slt, %440, %441 : vector<1x256xi32>
    %443 = arith.andi %438, %442 : vector<1x256xi1>
    %cst_161 = arith.constant 0.000000e+00 : f32
    %444 = vector.broadcast %cst_161 : f32 to vector<4x256xf32>
    %445 = vector.extract_strided_slice %253 {offsets = [0, 4], sizes = [4, 1], strides = [1, 1]} : vector<4x25xf32> to vector<4x1xf32>
    %c0_162 = arith.constant 0 : index
    %c98_163 = arith.constant 98 : index
    %446 = vector.load %arg12[%c0_162, %c98_163] : memref<4x512xf32, #tpu.memory_space<vmem>>, vector<4x256xf32>
    %447 = vector.broadcast %445 : vector<4x1xf32> to vector<4x256xf32>
    %448 = arith.mulf %447, %446 : vector<4x256xf32>
    %449 = arith.addf %444, %448 : vector<4x256xf32>
    %450 = vector.extract_strided_slice %253 {offsets = [0, 9], sizes = [4, 1], strides = [1, 1]} : vector<4x25xf32> to vector<4x1xf32>
    %c0_164 = arith.constant 0 : index
    %c114_165 = arith.constant 114 : index
    %451 = vector.load %arg12[%c0_164, %c114_165] : memref<4x512xf32, #tpu.memory_space<vmem>>, vector<4x256xf32>
    %452 = vector.broadcast %450 : vector<4x1xf32> to vector<4x256xf32>
    %453 = arith.mulf %452, %451 : vector<4x256xf32>
    %454 = arith.addf %449, %453 : vector<4x256xf32>
    %455 = vector.extract_strided_slice %253 {offsets = [0, 14], sizes = [4, 1], strides = [1, 1]} : vector<4x25xf32> to vector<4x1xf32>
    %c0_166 = arith.constant 0 : index
    %c130_167 = arith.constant 130 : index
    %456 = vector.load %arg12[%c0_166, %c130_167] : memref<4x512xf32, #tpu.memory_space<vmem>>, vector<4x256xf32>
    %457 = vector.broadcast %455 : vector<4x1xf32> to vector<4x256xf32>
    %458 = arith.mulf %457, %456 : vector<4x256xf32>
    %459 = arith.addf %454, %458 : vector<4x256xf32>
    %460 = vector.extract_strided_slice %253 {offsets = [0, 19], sizes = [4, 1], strides = [1, 1]} : vector<4x25xf32> to vector<4x1xf32>
    %c0_168 = arith.constant 0 : index
    %c146_169 = arith.constant 146 : index
    %461 = vector.load %arg12[%c0_168, %c146_169] : memref<4x512xf32, #tpu.memory_space<vmem>>, vector<4x256xf32>
    %462 = vector.broadcast %460 : vector<4x1xf32> to vector<4x256xf32>
    %463 = arith.mulf %462, %461 : vector<4x256xf32>
    %464 = arith.addf %459, %463 : vector<4x256xf32>
    %465 = vector.extract_strided_slice %253 {offsets = [0, 24], sizes = [4, 1], strides = [1, 1]} : vector<4x25xf32> to vector<4x1xf32>
    %c0_170 = arith.constant 0 : index
    %c162_171 = arith.constant 162 : index
    %466 = vector.load %arg12[%c0_170, %c162_171] : memref<4x512xf32, #tpu.memory_space<vmem>>, vector<4x256xf32>
    %467 = vector.broadcast %465 : vector<4x1xf32> to vector<4x256xf32>
    %468 = arith.mulf %467, %466 : vector<4x256xf32>
    %469 = arith.addf %464, %468 : vector<4x256xf32>
    %cst_172 = arith.constant 0.000000e+00 : f32
    %470 = vector.shape_cast %443 : vector<1x256xi1> to vector<1x256xi1>
    %471 = vector.broadcast %470 : vector<1x256xi1> to vector<4x256xi1>
    %472 = vector.broadcast %cst_172 : f32 to vector<4x256xf32>
    %473 = arith.select %471, %469, %472 : vector<4x256xi1>, vector<4x256xf32>
    %474 = arith.addf %434, %473 : vector<4x256xf32>
    %c0_173 = arith.constant 0 : index
    %c0_174 = arith.constant 0 : index
    %475 = vector.load %arg9[%c0_173, %c0_174] : memref<4x1xf32, #tpu.memory_space<vmem>>, vector<4x1xf32>
    %476 = vector.broadcast %475 : vector<4x1xf32> to vector<4x256xf32>
    %477 = arith.addf %474, %476 : vector<4x256xf32>
    %478 = vector.extract_strided_slice %1 {offsets = [0, 0], sizes = [4, 256], strides = [1, 1]} : vector<8x256xf32> to vector<4x256xf32>
    %479 = arith.addf %252, %478 : vector<4x256xf32>
    %c0_175 = arith.constant 0 : index
    %c0_176 = arith.constant 0 : index
    %c0_177 = arith.constant 0 : index
    %480 = vector.load %arg10[%c0_175, %c0_176, %c0_177] : memref<1x8x256xf32, #tpu.memory_space<vmem>>, vector<1x4x256xf32>
    %481 = vector.shape_cast %480 : vector<1x4x256xf32> to vector<4x256xf32>
    %482 = vector.shape_cast %479 : vector<4x256xf32> to vector<1x4x256xf32>
    tpu.vector_store %arg10[%c0_175, %c0_176, %c0_177], %482 {strides = array<i32>} : memref<1x8x256xf32, #tpu.memory_space<vmem>>, vector<1x4x256xf32>,
    %483 = vector.extract_strided_slice %1 {offsets = [4, 0], sizes = [4, 256], strides = [1, 1]} : vector<8x256xf32> to vector<4x256xf32>
    %484 = arith.addf %477, %483 : vector<4x256xf32>
    %c0_178 = arith.constant 0 : index
    %c4 = arith.constant 4 : index
    %c0_179 = arith.constant 0 : index
    %485 = vector.load %arg10[%c0_178, %c4, %c0_179] : memref<1x8x256xf32, #tpu.memory_space<vmem>>, vector<1x4x256xf32>
    %486 = vector.shape_cast %485 : vector<1x4x256xf32> to vector<4x256xf32>
    %487 = vector.shape_cast %484 : vector<4x256xf32> to vector<1x4x256xf32>
    tpu.vector_store %arg10[%c0_178, %c4, %c0_179], %487 {strides = array<i32>} : memref<1x8x256xf32, #tpu.memory_space<vmem>>, vector<1x4x256xf32>,
    return
  }
  func.func @transform_0(%arg0: i32) -> (i32, i32, i32) {
    %c0_i32 = arith.constant 0 : i32
    %c0_i32_0 = arith.constant 0 : i32
    %c0_i32_1 = arith.constant 0 : i32
    return %arg0, %c0_i32, %c0_i32_0 : i32, i32, i32
  }
  func.func @transform_1(%arg0: i32) -> (i32, i32) {
    %c0_i32 = arith.constant 0 : i32
    %c0_i32_0 = arith.constant 0 : i32
    %c0_i32_1 = arith.constant 0 : i32
    return %c0_i32, %c0_i32_0 : i32, i32
  }
  func.func @transform_2(%arg0: i32) -> (i32, i32) {
    %c0_i32 = arith.constant 0 : i32
    %c0_i32_0 = arith.constant 0 : i32
    %c0_i32_1 = arith.constant 0 : i32
    return %c0_i32, %c0_i32_0 : i32, i32
  }
  func.func @transform_3(%arg0: i32) -> (i32, i32) {
    %c0_i32 = arith.constant 0 : i32
    %c0_i32_0 = arith.constant 0 : i32
    %c0_i32_1 = arith.constant 0 : i32
    return %c0_i32, %c0_i32_0 : i32, i32
  }
  func.func @transform_4(%arg0: i32) -> (i32, i32) {
    %c0_i32 = arith.constant 0 : i32
    %c0_i32_0 = arith.constant 0 : i32
    %c0_i32_1 = arith.constant 0 : i32
    return %c0_i32, %c0_i32_0 : i32, i32
  }
  func.func @transform_5(%arg0: i32) -> (i32, i32) {
    %c0_i32 = arith.constant 0 : i32
    %c0_i32_0 = arith.constant 0 : i32
    %c0_i32_1 = arith.constant 0 : i32
    return %c0_i32, %c0_i32_0 : i32, i32
  }
  func.func @transform_6(%arg0: i32) -> (i32, i32) {
    %c0_i32 = arith.constant 0 : i32
    %c0_i32_0 = arith.constant 0 : i32
    %c0_i32_1 = arith.constant 0 : i32
    return %c0_i32, %c0_i32_0 : i32, i32
  }
  func.func @transform_7(%arg0: i32) -> (i32, i32) {
    %c0_i32 = arith.constant 0 : i32
    %c0_i32_0 = arith.constant 0 : i32
    %c0_i32_1 = arith.constant 0 : i32
    return %c0_i32, %c0_i32_0 : i32, i32
  }
  func.func @transform_8(%arg0: i32) -> (i32, i32) {
    %c0_i32 = arith.constant 0 : i32
    %c0_i32_0 = arith.constant 0 : i32
    %c0_i32_1 = arith.constant 0 : i32
    return %c0_i32, %c0_i32_0 : i32, i32
  }
  func.func @transform_9(%arg0: i32) -> (i32, i32, i32) {
    %c0_i32 = arith.constant 0 : i32
    %c0_i32_0 = arith.constant 0 : i32
    %c0_i32_1 = arith.constant 0 : i32
    return %arg0, %c0_i32, %c0_i32_0 : i32, i32, i32
  }
}

</mosaic_0001>

<llo_original>
// kernel: tpu_custom_call.1
$region0: #{tpu_custom_call.1}
  #allocation0 [shape = 'u32[]', space=smem, size = 0x4, offset = 0x4, fixed_abs, tag = 'smem constant byte address 0x4 - core index']
  #allocation1 [shape = 'u32[144,128]{1,0:T(1,128)}', space=vmem, size = 0x12000, scoped, tag = 'internal scratch']
  #allocation2 [shape = 'f32[2,512]{1,0:T(2,128)}', space=vmem, size = 0x1000, scoped, tag = 'scratch operand']
  #allocation3 [shape = 'f32[4,512]{1,0:T(4,128)}', space=vmem, size = 0x2000, scoped, tag = 'scratch operand']
  %s0 = inlined_call_operand.hbm [shape: f32[2,8,256], index: 0, kind: input, shape index: {}]
  %s1 = inlined_call_operand.vmem [shape: f32[2,8], index: 1, kind: input, shape index: {}]
  %s2 = inlined_call_operand.vmem [shape: f32[2,1], index: 2, kind: input, shape index: {}]
  %s3 = inlined_call_operand.vmem [shape: f32[2,25], index: 3, kind: input, shape index: {}]
  %s4 = inlined_call_operand.vmem [shape: f32[2,1], index: 4, kind: input, shape index: {}]
  %s5 = inlined_call_operand.vmem [shape: f32[4,4], index: 5, kind: input, shape index: {}]
  %s6 = inlined_call_operand.vmem [shape: f32[4,1], index: 6, kind: input, shape index: {}]
  %s7 = inlined_call_operand.vmem [shape: f32[4,25], index: 7, kind: input, shape index: {}]
  %s8 = inlined_call_operand.vmem [shape: f32[4,1], index: 8, kind: input, shape index: {}]
  %s9 = inlined_call_operand.hbm [shape: f32[2,8,256], index: 9, kind: output, shape index: {}]
  %s10 = sld [smem:[#allocation0]]
  $region73: #{tpu_custom_call.1} parent=0
    _
  %s12 = ssub.s32 1, %s10
  %s13 = scalar_select 0, %s12, %s10
  $region1: #{tpu_custom_call.1} parent=0
    #allocation4 [shape = 'u8[16384]{0}', space=vmem, size = 0x4000, scoped, tag = 'input window, operand 0']
    #allocation5 [shape = 's32[2]{0}', space=sflag, size = 0x8, scoped, tag = 'scoped memory for tpu_custom_call.1']
    #allocation6 [shape = 's32[2]{0}', space=sflag, size = 0x8, scoped, tag = 'scoped memory for tpu_custom_call.1']
    #allocation7 [shape = 'u8[16384]{0}', space=vmem, size = 0x4000, scoped, tag = 'output window, operand 0']
    %14 = vsyncpa [#allocation5], 0
    %s15 = scalar_lea.sflag [#allocation5], 1
    %16 = vsyncpa %s15, 0
    %17 = vsyncpa [#allocation6], 0
    %s18 = scalar_lea.sflag [#allocation6], 1
    %19 = vsyncpa %s18, 0
    loop: start=0, step=1, limit=4
    $region2: #{tpu_custom_call.1} parent=1 // loop_pre_header
      _
    $region3: #{tpu_custom_call.1} parent=1 // loop_header
      %s21 = sphi 0, %s25
      %p22 = scmp.ge.s32.totalorder %s21, 4
      %s31 = sphi 0, %s33
      %s34 = sphi 0, %s31
      %s35 = sphi 0, %s34
      %s51 = sphi 0, %s35
      %s55 = sphi 0, %s55
      %s57 = sphi 0, %s55
      %s58 = sphi 0, %s57
      %s72 = sphi 0, %s58
      %s76 = sphi 0, %s76
      %s78 = sphi 0, %s76
      %s79 = sphi 0, %s78
      %s93 = sphi 0, %s79
      %s97 = sphi 0, %s97
      %s99 = sphi 0, %s97
      %s100 = sphi 0, %s99
      %s114 = sphi 0, %s100
      %s118 = sphi 0, %s118
      %s120 = sphi 0, %s118
      %s121 = sphi 0, %s120
      %s135 = sphi 0, %s121
      %s139 = sphi 0, %s139
      %s141 = sphi 0, %s139
      %s142 = sphi 0, %s141
      %s156 = sphi 0, %s142
      %s160 = sphi 0, %s160
      %s162 = sphi 0, %s160
      %s163 = sphi 0, %s162
      %s177 = sphi 0, %s163
      %s181 = sphi 0, %s181
      %s183 = sphi 0, %s181
      %s184 = sphi 0, %s183
      %s198 = sphi 0, %s184
      %s202 = sphi 0, %s202
      %s204 = sphi 0, %s202
      %s205 = sphi 0, %s204
      %s219 = sphi 0, %s205
      %s225 = sphi 0, %s227
      %s228 = sphi 0, %s225
      %s229 = sphi 0, %s228
      %s245 = sphi 0, %s229
    $region4: #{tpu_custom_call.1} parent=1 // loop_header_branch
      %24 = sbr.rel (%p22) target = $region8
    $region5: #{tpu_custom_call.1} parent=1 // loop_body
      %s26 = ssub.s32 %s21, 1
      %s27 = ssub.s32 %s21, 2
      %s28 = sadd.s32 %s21, 1
      %s29 = ssub.s32 %s21, %s28
      %p30 = scmp.eq.s32.totalorder %s29, 0
      %s32 = sadd.s32 %s31, 1
      %s33 = scalar_select %p30, %s31, %s32
      %p36 = pneg %p30
      %p37 = scmp.eq.s32.totalorder %s21, 1
      %p38 = por %p36, %p37
      %p39 = scmp.ne.s32.totalorder %s31, %s34
      %p40 = scmp.eq.s32.totalorder %s21, 0
      %p41 = por %p39, %p40
      %p42 = scmp.ne.s32.totalorder %s31, %s34
      %p43 = scmp.eq.s32.totalorder %s26, 1
      %p44 = por %p42, %p43
      %p45 = scmp.ne.s32.totalorder %s34, %s35
      %p46 = scmp.eq.s32.totalorder %s26, 0
      %p47 = por %p45, %p46
      %p48 = scmp.ne.s32.totalorder %s34, %s35
      %p49 = scmp.eq.s32.totalorder %s27, 1
      %p50 = por %p48, %p49
      %p52 = scmp.ne.s32.totalorder %s35, %s51
      %p53 = scmp.eq.s32.totalorder %s27, 0
      %p54 = por %p52, %p53
      %s56 = sadd.s32 %s55, 1
      %p59 = scmp.eq.s32.totalorder %s21, 1
      %p60 = scmp.ne.s32.totalorder %s55, %s57
      %p61 = scmp.eq.s32.totalorder %s21, 0
      %p62 = por %p60, %p61
      %p63 = scmp.ne.s32.totalorder %s55, %s57
      %p64 = scmp.eq.s32.totalorder %s26, 1
      %p65 = por %p63, %p64
      %p66 = scmp.ne.s32.totalorder %s57, %s58
      %p67 = scmp.eq.s32.totalorder %s26, 0
      %p68 = por %p66, %p67
      %p69 = scmp.ne.s32.totalorder %s57, %s58
      %p70 = scmp.eq.s32.totalorder %s27, 1
      %p71 = por %p69, %p70
      %p73 = scmp.ne.s32.totalorder %s58, %s72
      %p74 = scmp.eq.s32.totalorder %s27, 0
      %p75 = por %p73, %p74
      %s77 = sadd.s32 %s76, 1
      %p80 = scmp.eq.s32.totalorder %s21, 1
      %p81 = scmp.ne.s32.totalorder %s76, %s78
      %p82 = scmp.eq.s32.totalorder %s21, 0
      %p83 = por %p81, %p82
      %p84 = scmp.ne.s32.totalorder %s76, %s78
      %p85 = scmp.eq.s32.totalorder %s26, 1
      %p86 = por %p84, %p85
      %p87 = scmp.ne.s32.totalorder %s78, %s79
      %p88 = scmp.eq.s32.totalorder %s26, 0
      %p89 = por %p87, %p88
      %p90 = scmp.ne.s32.totalorder %s78, %s79
      %p91 = scmp.eq.s32.totalorder %s27, 1
      %p92 = por %p90, %p91
      %p94 = scmp.ne.s32.totalorder %s79, %s93
      %p95 = scmp.eq.s32.totalorder %s27, 0
      %p96 = por %p94, %p95
      %s98 = sadd.s32 %s97, 1
      %p101 = scmp.eq.s32.totalorder %s21, 1
      %p102 = scmp.ne.s32.totalorder %s97, %s99
      %p103 = scmp.eq.s32.totalorder %s21, 0
      %p104 = por %p102, %p103
      %p105 = scmp.ne.s32.totalorder %s97, %s99
      %p106 = scmp.eq.s32.totalorder %s26, 1
      %p107 = por %p105, %p106
      %p108 = scmp.ne.s32.totalorder %s99, %s100
      %p109 = scmp.eq.s32.totalorder %s26, 0
      %p110 = por %p108, %p109
      %p111 = scmp.ne.s32.totalorder %s99, %s100
      %p112 = scmp.eq.s32.totalorder %s27, 1
      %p113 = por %p111, %p112
      %p115 = scmp.ne.s32.totalorder %s100, %s114
      %p116 = scmp.eq.s32.totalorder %s27, 0
      %p117 = por %p115, %p116
      %s119 = sadd.s32 %s118, 1
      %p122 = scmp.eq.s32.totalorder %s21, 1
      %p123 = scmp.ne.s32.totalorder %s118, %s120
      %p124 = scmp.eq.s32.totalorder %s21, 0
      %p125 = por %p123, %p124
      %p126 = scmp.ne.s32.totalorder %s118, %s120
      %p127 = scmp.eq.s32.totalorder %s26, 1
      %p128 = por %p126, %p127
      %p129 = scmp.ne.s32.totalorder %s120, %s121
      %p130 = scmp.eq.s32.totalorder %s26, 0
      %p131 = por %p129, %p130
      %p132 = scmp.ne.s32.totalorder %s120, %s121
      %p133 = scmp.eq.s32.totalorder %s27, 1
      %p134 = por %p132, %p133
      %p136 = scmp.ne.s32.totalorder %s121, %s135
      %p137 = scmp.eq.s32.totalorder %s27, 0
      %p138 = por %p136, %p137
      %s140 = sadd.s32 %s139, 1
      %p143 = scmp.eq.s32.totalorder %s21, 1
      %p144 = scmp.ne.s32.totalorder %s139, %s141
      %p145 = scmp.eq.s32.totalorder %s21, 0
      %p146 = por %p144, %p145
      %p147 = scmp.ne.s32.totalorder %s139, %s141
      %p148 = scmp.eq.s32.totalorder %s26, 1
      %p149 = por %p147, %p148
      %p150 = scmp.ne.s32.totalorder %s141, %s142
      %p151 = scmp.eq.s32.totalorder %s26, 0
      %p152 = por %p150, %p151
      %p153 = scmp.ne.s32.totalorder %s141, %s142
      %p154 = scmp.eq.s32.totalorder %s27, 1
      %p155 = por %p153, %p154
      %p157 = scmp.ne.s32.totalorder %s142, %s156
      %p158 = scmp.eq.s32.totalorder %s27, 0
      %p159 = por %p157, %p158
      %s161 = sadd.s32 %s160, 1
      %p164 = scmp.eq.s32.totalorder %s21, 1
      %p165 = scmp.ne.s32.totalorder %s160, %s162
      %p166 = scmp.eq.s32.totalorder %s21, 0
      %p167 = por %p165, %p166
      %p168 = scmp.ne.s32.totalorder %s160, %s162
      %p169 = scmp.eq.s32.totalorder %s26, 1
      %p170 = por %p168, %p169
      %p171 = scmp.ne.s32.totalorder %s162, %s163
      %p172 = scmp.eq.s32.totalorder %s26, 0
      %p173 = por %p171, %p172
      %p174 = scmp.ne.s32.totalorder %s162, %s163
      %p175 = scmp.eq.s32.totalorder %s27, 1
      %p176 = por %p174, %p175
      %p178 = scmp.ne.s32.totalorder %s163, %s177
      %p179 = scmp.eq.s32.totalorder %s27, 0
      %p180 = por %p178, %p179
      %s182 = sadd.s32 %s181, 1
      %p185 = scmp.eq.s32.totalorder %s21, 1
      %p186 = scmp.ne.s32.totalorder %s181, %s183
      %p187 = scmp.eq.s32.totalorder %s21, 0
      %p188 = por %p186, %p187
      %p189 = scmp.ne.s32.totalorder %s181, %s183
      %p190 = scmp.eq.s32.totalorder %s26, 1
      %p191 = por %p189, %p190
      %p192 = scmp.ne.s32.totalorder %s183, %s184
      %p193 = scmp.eq.s32.totalorder %s26, 0
      %p194 = por %p192, %p193
      %p195 = scmp.ne.s32.totalorder %s183, %s184
      %p196 = scmp.eq.s32.totalorder %s27, 1
      %p197 = por %p195, %p196
      %p199 = scmp.ne.s32.totalorder %s184, %s198
      %p200 = scmp.eq.s32.totalorder %s27, 0
      %p201 = por %p199, %p200
      %s203 = sadd.s32 %s202, 1
      %p206 = scmp.eq.s32.totalorder %s21, 1
      %p207 = scmp.ne.s32.totalorder %s202, %s204
      %p208 = scmp.eq.s32.totalorder %s21, 0
      %p209 = por %p207, %p208
      %p210 = scmp.ne.s32.totalorder %s202, %s204
      %p211 = scmp.eq.s32.totalorder %s26, 1
      %p212 = por %p210, %p211
      %p213 = scmp.ne.s32.totalorder %s204, %s205
      %p214 = scmp.eq.s32.totalorder %s26, 0
      %p215 = por %p213, %p214
      %p216 = scmp.ne.s32.totalorder %s204, %s205
      %p217 = scmp.eq.s32.totalorder %s27, 1
      %p218 = por %p216, %p217
      %p220 = scmp.ne.s32.totalorder %s205, %s219
      %p221 = scmp.eq.s32.totalorder %s27, 0
      %p222 = por %p220, %p221
      %s223 = ssub.s32 %s21, %s28
      %p224 = scmp.eq.s32.totalorder %s223, 0
      %s226 = sadd.s32 %s225, 1
      %s227 = scalar_select %p224, %s225, %s226
      %p230 = pneg %p224
      %p231 = scmp.eq.s32.totalorder %s21, 1
      %p232 = por %p230, %p231
      %p233 = scmp.ne.s32.totalorder %s225, %s228
      %p234 = scmp.eq.s32.totalorder %s21, 0
      %p235 = por %p233, %p234
      %p236 = scmp.ne.s32.totalorder %s225, %s228
      %p237 = scmp.eq.s32.totalorder %s26, 1
      %p238 = por %p236, %p237
      %p239 = scmp.ne.s32.totalorder %s228, %s229
      %p240 = scmp.eq.s32.totalorder %s26, 0
      %p241 = por %p239, %p240
      %p242 = scmp.ne.s32.totalorder %s228, %s229
      %p243 = scmp.eq.s32.totalorder %s27, 1
      %p244 = por %p242, %p243
      %p246 = scmp.ne.s32.totalorder %s229, %s245
      %p247 = scmp.eq.s32.totalorder %s27, 0
      %p248 = por %p246, %p247
      %p249 = scmp.le.s32.totalorder 1, %s21
      %p250 = scmp.lt.s32.totalorder %s21, 3
      %p251 = pnand %p249, %p250
      %p252 = pneg %p251
      // Predicated region
      $region9: #{tpu_custom_call.1} parent=5 // pred_check
        _
      $region10: #{tpu_custom_call.1} parent=5 // pred_check_branch
        %254 = sbr.rel (%p251) target = $region12
      $region11: #{tpu_custom_call.1} parent=5 // pred_region
        %s255 = ssub.s32 %s21, 1
        // Predicated region
        $region13: #{tpu_custom_call.1} parent=11 // pred_check
          %p256 = pneg %p68
        $region14: #{tpu_custom_call.1} parent=11 // pred_check_branch
          %258 = sbr.rel (%p256) target = $region16
        $region15: #{tpu_custom_call.1} parent=11 // pred_region
          _
        $region16: #{tpu_custom_call.1} parent=11 // pred_fallthru
          _
        // Predicated region
        $region17: #{tpu_custom_call.1} parent=11 // pred_check
          %p259 = pneg %p89
        $region18: #{tpu_custom_call.1} parent=11 // pred_check_branch
          %261 = sbr.rel (%p259) target = $region20
        $region19: #{tpu_custom_call.1} parent=11 // pred_region
          _
        $region20: #{tpu_custom_call.1} parent=11 // pred_fallthru
          _
        // Predicated region
        $region21: #{tpu_custom_call.1} parent=11 // pred_check
          %p262 = pneg %p110
        $region22: #{tpu_custom_call.1} parent=11 // pred_check_branch
          %264 = sbr.rel (%p262) target = $region24
        $region23: #{tpu_custom_call.1} parent=11 // pred_region
          _
        $region24: #{tpu_custom_call.1} parent=11 // pred_fallthru
          _
        // Predicated region
        $region25: #{tpu_custom_call.1} parent=11 // pred_check
          %p265 = pneg %p131
        $region26: #{tpu_custom_call.1} parent=11 // pred_check_branch
          %267 = sbr.rel (%p265) target = $region28
        $region27: #{tpu_custom_call.1} parent=11 // pred_region
          _
        $region28: #{tpu_custom_call.1} parent=11 // pred_fallthru
          _
        // Predicated region
        $region29: #{tpu_custom_call.1} parent=11 // pred_check
          %p268 = pneg %p152
        $region30: #{tpu_custom_call.1} parent=11 // pred_check_branch
          %270 = sbr.rel (%p268) target = $region32
        $region31: #{tpu_custom_call.1} parent=11 // pred_region
          _
        $region32: #{tpu_custom_call.1} parent=11 // pred_fallthru
          _
        // Predicated region
        $region33: #{tpu_custom_call.1} parent=11 // pred_check
          %p271 = pneg %p173
        $region34: #{tpu_custom_call.1} parent=11 // pred_check_branch
          %273 = sbr.rel (%p271) target = $region36
        $region35: #{tpu_custom_call.1} parent=11 // pred_region
          _
        $region36: #{tpu_custom_call.1} parent=11 // pred_fallthru
          _
        // Predicated region
        $region37: #{tpu_custom_call.1} parent=11 // pred_check
          %p274 = pneg %p194
        $region38: #{tpu_custom_call.1} parent=11 // pred_check_branch
          %276 = sbr.rel (%p274) target = $region40
        $region39: #{tpu_custom_call.1} parent=11 // pred_region
          _
        $region40: #{tpu_custom_call.1} parent=11 // pred_fallthru
          _
        // Predicated region
        $region41: #{tpu_custom_call.1} parent=11 // pred_check
          %p277 = pneg %p215
        $region42: #{tpu_custom_call.1} parent=11 // pred_check_branch
          %279 = sbr.rel (%p277) target = $region44
        $region43: #{tpu_custom_call.1} parent=11 // pred_region
          _
        $region44: #{tpu_custom_call.1} parent=11 // pred_fallthru
          _
      $region12: #{tpu_custom_call.1} parent=5 // pred_fallthru
        _
      %p280 = scmp.lt.s32.totalorder %s21, 2
      // Predicated region
      $region45: #{tpu_custom_call.1} parent=5 // pred_check
        %p281 = pneg %p280
      $region46: #{tpu_custom_call.1} parent=5 // pred_check_branch
        %283 = sbr.rel (%p281) target = $region48
      $region47: #{tpu_custom_call.1} parent=5 // pred_region
        // Predicated region
        $region49: #{tpu_custom_call.1} parent=47 // pred_check
          %p284 = pneg %p41
        $region50: #{tpu_custom_call.1} parent=47 // pred_check_branch
          %286 = sbr.rel (%p284) target = $region52
        $region51: #{tpu_custom_call.1} parent=47 // pred_region
          %s287 = sand.u32 %s31, 1
          %s288 = scalar_lea.sflag [#allocation5], %s287
          %s289 = sand.u32 %s31, 1
          %s290 = smul.addr %s289, 16
          %s291 = scalar_lea.vmem [#allocation4], %s290
          %s293 = ssub.s32 256, 256
          %294 = vsyncadd %s288, %s293
          %s295 = smul.addr %s21, 2
          %s296 = smul.addr %s295, 128
          %s297 = scalar_lea.hbm %s0, %s296
          %s299 = sshll.u32 %s291, 4
          %s300 = int_to_ptr.vmem [resolvable:$true] %s299
          %302 = dma.hbm_to_vmem [thread:$0]  %s297, 256, %s300, %s288
        $region52: #{tpu_custom_call.1} parent=47 // pred_fallthru
          _
      $region48: #{tpu_custom_call.1} parent=5 // pred_fallthru
        _
      %p303 = scmp.le.s32.totalorder 1, %s21
      %p304 = scmp.lt.s32.totalorder %s21, 3
      %p305 = pnand %p303, %p304
      %p306 = pneg %p305
      // Predicated region
      $region53: #{tpu_custom_call.1} parent=5 // pred_check
        _
      $region54: #{tpu_custom_call.1} parent=5 // pred_check_branch
        %308 = sbr.rel (%p305) target = $region56
      $region55: #{tpu_custom_call.1} parent=5 // pred_region
        %s309 = ssub.s32 %s21, 1
        %s310 = sand.u32 %s34, 1
        %s311 = scalar_lea.sflag [#allocation5], %s310
        %s312 = sand.u32 %s34, 1
        %s313 = smul.addr %s312, 16
        %s314 = scalar_lea.vmem [#allocation4], %s313
        // Predicated region
        $region57: #{tpu_custom_call.1} parent=55 // pred_check
          %p315 = pneg %p47
        $region58: #{tpu_custom_call.1} parent=55 // pred_check_branch
          %317 = sbr.rel (%p315) target = $region60
        $region59: #{tpu_custom_call.1} parent=55 // pred_region
          %318 = dma.done %s311, 256
        $region60: #{tpu_custom_call.1} parent=55 // pred_fallthru
          _
        %s319 = sand.u32 %s34, 1
        %s320 = scalar_lea.sflag [#allocation5], %s319
        %s321 = sand.u32 %s34, 1
        %s322 = smul.addr %s321, 16
        %s323 = scalar_lea.vmem [#allocation4], %s322
        %p324 = pneg %p47
        %p325 = pneg %p44
        %p326 = pneg %p68
        %p327 = pneg %p65
        %p328 = pneg %p89
        %p329 = pneg %p86
        %p330 = pneg %p110
        %p331 = pneg %p107
        %p332 = pneg %p131
        %p333 = pneg %p128
        %p334 = pneg %p152
        %p335 = pneg %p149
        %p336 = pneg %p173
        %p337 = pneg %p170
        %p338 = pneg %p194
        %p339 = pneg %p191
        %p340 = pneg %p215
        %p341 = pneg %p212
        %p342 = pneg %p241
        %p343 = pneg %p238
        %s344 = sand.u32 %s228, 1
        %s345 = scalar_lea.sflag [#allocation6], %s344
        %s346 = sand.u32 %s228, 1
        %s347 = smul.addr %s346, 16
        %s348 = scalar_lea.vmem [#allocation7], %s347
        %v349 = vld [vmem:[%s314] sm:$0xff]
        %v350 = vld [vmem:[%s314 + $0x8] sm:$0xff]
        %v351 = vld [vmem:[%s1] sm:$0x3]
        %v352 = vld [vmem:[%s2] sm:$0x3]
        %354 = vset.pattern.permute.xlu0 0
        %355 = vperm.xlu0 %354, %v352
        %v356 = vpop.permute.xlu0 %355
        %vm358 = vcmask 64512
        %v360 = vsel %vm358, %v351, 0
        %362 = vmatprep.subr.mxu0 %v350
        %363 = vmatpush1.msra.mxu0 %v349
        %364 = vmatprep.subr.mxu0 0.0
        %365 = vmatpush1.msra.mxu0 0.0
        %366 = vmatprep.subr.mxu0 0.0
        %367 = vmatpush1.msra.mxu0 0.0
        %368 = vmatprep.subr.mxu0 0.0
        %369 = vmatpush1.msra.mxu0 0.0
        %370 = vmatprep.subr.mxu0 0.0
        %371 = vmatpush1.msra.mxu0 0.0
        %372 = vmatprep.subr.mxu0 0.0
        %373 = vmatpush1.msra.mxu0 0.0
        %374 = vmatprep.subr.mxu0 0.0
        %375 = vmatpush1.msra.mxu0 0.0
        %376 = vmatprep.subr.mxu0 0.0
        %377 = vmatpush1.msra.mxu0 0.0
        %378 = vmatprep.subr.mxu0 0.0
        %379 = vmatpush1.msra.mxu0 0.0
        %380 = vmatprep.subr.mxu0 0.0
        %381 = vmatpush1.msra.mxu0 0.0
        %382 = vmatprep.subr.mxu0 0.0
        %383 = vmatpush1.msra.mxu0 0.0
        %384 = vmatprep.subr.mxu0 0.0
        %385 = vmatpush1.msra.mxu0 0.0
        %386 = vmatprep.subr.mxu0 0.0
        %387 = vmatpush1.msra.mxu0 0.0
        %388 = vmatprep.subr.mxu0 0.0
        %389 = vmatpush1.msra.mxu0 0.0
        %390 = vmatprep.subr.mxu0 0.0
        %391 = vmatpush1.msra.mxu0 0.0
        %392 = vmatprep.subr.mxu0 0.0
        %393 = vmatpush1.msra.mxu0 0.0
        %394 = vmatprep.subr.mxu0 0.0
        %395 = vmatpush1.msra.mxu0 0.0
        %396 = vmatprep.subr.mxu0 0.0
        %397 = vmatpush1.msra.mxu0 0.0
        %398 = vmatprep.subr.mxu0 0.0
        %399 = vmatpush1.msra.mxu0 0.0
        %400 = vmatprep.subr.mxu0 0.0
        %401 = vmatpush1.msra.mxu0 0.0
        %402 = vmatprep.subr.mxu0 0.0
        %403 = vmatpush1.msra.mxu0 0.0
        %404 = vmatprep.subr.mxu0 0.0
        %405 = vmatpush1.msra.mxu0 0.0
        %406 = vmatprep.subr.mxu0 0.0
        %407 = vmatpush1.msra.mxu0 0.0
        %408 = vmatprep.subr.mxu0 0.0
        %409 = vmatpush1.msra.mxu0 0.0
        %410 = vmatprep.subr.mxu0 0.0
        %411 = vmatpush1.msra.mxu0 0.0
        %412 = vmatprep.subr.mxu0 0.0
        %413 = vmatpush1.msra.mxu0 0.0
        %414 = vmatprep.subr.mxu0 0.0
        %415 = vmatpush1.msra.mxu0 0.0
        %416 = vmatprep.subr.mxu0 0.0
        %417 = vmatpush1.msra.mxu0 0.0
        %418 = vmatprep.subr.mxu0 0.0
        %419 = vmatpush1.msra.mxu0 0.0
        %420 = vmatprep.subr.mxu0 0.0
        %421 = vmatpush1.msra.mxu0 0.0
        %422 = vmatprep.subr.mxu0 0.0
        %423 = vmatpush1.msra.mxu0 0.0
        %424 = vmatprep.subr.mxu0 0.0
        %425 = vmatpush1.msra.mxu0 0.0
        %426 = vmatprep.mubr.f32.mxu0 0.0
        %427 = vmatmul.mubr.f32.gmra.mrb[0].mxu0 %v360
        %v428 = vpop.f32.mrb[0].mxu0
        %v429 = vadd.f32 %v356, %v428
        %v430 = vpop.f32.mrb[0].mxu0
        %v431 = vadd.f32 %v356, %v430
        %432 = vdwg.mxu0
        %v433 = vxor.u32 %v429, 2147483648
        %v434 = vxor.u32 %v431, 2147483648
        %v435 = vmul.f32 %v433, 1.442695
        %v436 = vpow.pop %v435
        %v437 = vmul.f32 %v434, 1.442695
        %v438 = vpow.pop %v437
        %v439 = vadd.f32 %v436, 1.0
        %v440 = vadd.f32 %v438, 1.0
        %v441 = vrcp.pop %v439
        %v442 = vmul.f32 1.0, %v441
        %v443 = vrcp.pop %v440
        %v444 = vmul.f32 1.0, %v443
        %v445 = vmul.f32 %v429, %v442
        %v446 = vmul.f32 %v431, %v444
        %v447 = vld [vmem:[%s3] sm:$0x3]
        %448 = vst [vmem:[#allocation2] sm:$0xff] 0.0
        %v451 = vcombine.low %v445, %v446
        %v453 = vunpack.c.l.s4 1983009808
        %v454 = vunpack.c.0.s8 %v453
        %v455 = vlaneseq
        %v456 = vshrl.u32 %v455, 7
        %v457 = vsub.s32 %v454, %v456
        %v458 = vrot.slane %v451, %v457
        %460 = vst [vmem:[#allocation2 + $0x2] sm:$0xf] %v458
        %v461 = vlaneseq
        %v462 = vand.u32 %v461, 127
        %v463 = vadd.s32 %v462, 128
        %vm464 = vcmp.lt.s32.totalorder %v462, 0
        %v465 = vsub.s32 0, %v462
        %v466 = vsel %vm464, %v465, %v462
        %v467 = vshrl.u32 %v466, 4
        %v468 = vand.u32 %v466, 15
        %v469 = vsub.s32 0, %v468
        %v470 = vsel %vm464, %v469, %v468
        %vm471 = vcmp.lt.s32.totalorder %v463, 0
        %v472 = vsub.s32 0, %v463
        %v473 = vsel %vm471, %v472, %v463
        %v474 = vshrl.u32 %v473, 4
        %v475 = vand.u32 %v473, 15
        %v476 = vsub.s32 0, %v475
        %v477 = vsel %vm471, %v476, %v475
        %vm478 = vcmp.ne.s32.totalorder %v470, 0
        %vm479 = vcmp.ne.s32.totalorder %v477, 0
        %vm480 = vcmp.lt.s32.totalorder %v470, 0
        %vm481 = vcmp.lt.s32.totalorder %v477, 0
        %vm482 = vmand %vm480, %vm478
        %vm483 = vmand %vm481, %vm479
        %v484 = vadd.s32 %v470, 16
        %v485 = vadd.s32 %v477, 16
        %v486 = vsel %vm482, %v484, %v470
        %v487 = vsel %vm483, %v485, %v477
        %v488 = vadd.s32 %v486, 4294967294
        %v489 = vadd.s32 %v487, 4294967294
        %vm490 = vcmp.ge.s32.totalorder %v488, 0
        %vm491 = vcmp.ge.s32.totalorder %v489, 0
        %vm492 = vcmp.lt.s32.totalorder %v488, 16
        %vm493 = vcmp.lt.s32.totalorder %v489, 16
        %vm494 = vmand %vm490, %vm492
        %vm495 = vmand %vm491, %vm493
        %v496 = vld [vmem:[#allocation2] sm:$0x3f]
        %498 = vset.pattern.permute.xlu0 0
        %499 = vperm.xlu0 %498, %v447
        %v500 = vpop.permute.xlu0 %499
        %v503 = vcombine.high %v496, %v496
        %v505 = vunpack.c.l.s4 1983009808
        %v506 = vunpack.c.0.s8 %v505
        %v507 = vlaneseq
        %v508 = vshrl.u32 %v507, 7
        %v509 = vsub.s32 %v506, %v508
        %v510 = vrot.slane %v496, %v509
        %v512 = vunpack.c.l.s4 1983009808
        %v513 = vunpack.c.0.s8 %v512
        %v514 = vlaneseq
        %v515 = vshrl.u32 %v514, 7
        %v516 = vsub.s32 %v513, %v515
        %v517 = vrot.slane %v503, %v516
        %v518 = vcombine.high %v510, %v510
        %519 = vrot.lane.b32.xlu0 %v510, 34
        %v520 = vpop.permute.xlu0 %519
        %521 = vrot.lane.b32.xlu0 %v518, 34
        %v522 = vpop.permute.xlu0 %521
        %523 = vrot.lane.b32.xlu0 %v517, 34
        %v524 = vpop.permute.xlu0 %523
        %vm525 = vcmask 277504
        %v526 = vsel %vm525, %v520, %v522
        %v527 = vsel %vm525, %v522, %v524
        %v530 = vmul.f32 %v500, %v526
        %v531 = vmul.f32 %v500, %v527
        %v532 = vadd.f32 %v530, 0.0
        %v533 = vadd.f32 %v531, 0.0
        %v534 = vld [vmem:[#allocation2] sm:$0x3f]
        %535 = vset.pattern.permute.xlu0 5
        %536 = vperm.xlu0 %535, %v447
        %v537 = vpop.permute.xlu0 %536
        %v540 = vcombine.high %v534, %v534
        %v542 = vunpack.c.l.s4 1983009808
        %v543 = vunpack.c.0.s8 %v542
        %v544 = vlaneseq
        %v545 = vshrl.u32 %v544, 7
        %v546 = vsub.s32 %v543, %v545
        %v547 = vrot.slane %v534, %v546
        %v549 = vunpack.c.l.s4 1983009808
        %v550 = vunpack.c.0.s8 %v549
        %v551 = vlaneseq
        %v552 = vshrl.u32 %v551, 7
        %v553 = vsub.s32 %v550, %v552
        %v554 = vrot.slane %v540, %v553
        %v555 = vcombine.high %v547, %v547
        %556 = vrot.lane.b32.xlu0 %v547, 18
        %v557 = vpop.permute.xlu0 %556
        %558 = vrot.lane.b32.xlu0 %v555, 18
        %v559 = vpop.permute.xlu0 %558
        %560 = vrot.lane.b32.xlu0 %v554, 18
        %v561 = vpop.permute.xlu0 %560
        %vm562 = vcmask 146432
        %v563 = vsel %vm562, %v557, %v559
        %v564 = vsel %vm562, %v559, %v561
        %v567 = vmul.f32 %v537, %v563
        %v568 = vmul.f32 %v537, %v564
        %v569 = vadd.f32 %v532, %v567
        %v570 = vadd.f32 %v533, %v568
        %v571 = vld [vmem:[#allocation2] sm:$0x3f]
        %572 = vset.pattern.permute.xlu0 10
        %573 = vperm.xlu0 %572, %v447
        %v574 = vpop.permute.xlu0 %573
        %v577 = vcombine.high %v571, %v571
        %v579 = vunpack.c.l.s4 1983009808
        %v580 = vunpack.c.0.s8 %v579
        %v581 = vlaneseq
        %v582 = vshrl.u32 %v581, 7
        %v583 = vsub.s32 %v580, %v582
        %v584 = vrot.slane %v571, %v583
        %v586 = vunpack.c.l.s4 1983009808
        %v587 = vunpack.c.0.s8 %v586
        %v588 = vlaneseq
        %v589 = vshrl.u32 %v588, 7
        %v590 = vsub.s32 %v587, %v589
        %v591 = vrot.slane %v577, %v590
        %v592 = vcombine.high %v584, %v584
        %593 = vrot.lane.b32.xlu0 %v584, 2
        %v594 = vpop.permute.xlu0 %593
        %595 = vrot.lane.b32.xlu0 %v592, 2
        %v596 = vpop.permute.xlu0 %595
        %597 = vrot.lane.b32.xlu0 %v591, 2
        %v598 = vpop.permute.xlu0 %597
        %vm599 = vcmask 15360
        %v600 = vsel %vm599, %v594, %v596
        %v601 = vsel %vm599, %v596, %v598
        %v604 = vmul.f32 %v574, %v600
        %v605 = vmul.f32 %v574, %v601
        %v606 = vadd.f32 %v569, %v604
        %v607 = vadd.f32 %v570, %v605
        %v608 = vld [vmem:[#allocation2 + $0x2] sm:$0x3f]
        %609 = vset.pattern.permute.xlu0 15
        %610 = vperm.xlu0 %609, %v447
        %v611 = vpop.permute.xlu0 %610
        %v614 = vcombine.high %v608, %v608
        %v616 = vunpack.c.l.s4 1983009808
        %v617 = vunpack.c.0.s8 %v616
        %v618 = vlaneseq
        %v619 = vshrl.u32 %v618, 7
        %v620 = vsub.s32 %v617, %v619
        %v621 = vrot.slane %v608, %v620
        %v623 = vunpack.c.l.s4 1983009808
        %v624 = vunpack.c.0.s8 %v623
        %v625 = vlaneseq
        %v626 = vshrl.u32 %v625, 7
        %v627 = vsub.s32 %v624, %v626
        %v628 = vrot.slane %v614, %v627
        %v629 = vcombine.high %v621, %v621
        %630 = vrot.lane.b32.xlu0 %v621, 114
        %v631 = vpop.permute.xlu0 %630
        %632 = vrot.lane.b32.xlu0 %v629, 114
        %v633 = vpop.permute.xlu0 %632
        %634 = vrot.lane.b32.xlu0 %v628, 114
        %v635 = vpop.permute.xlu0 %634
        %vm636 = vcmask 932864
        %v637 = vsel %vm636, %v631, %v633
        %v638 = vsel %vm636, %v633, %v635
        %v641 = vmul.f32 %v611, %v637
        %v642 = vmul.f32 %v611, %v638
        %v643 = vadd.f32 %v606, %v641
        %v644 = vadd.f32 %v607, %v642
        %v645 = vld [vmem:[#allocation2 + $0x2] sm:$0x3f]
        %646 = vset.pattern.permute.xlu0 20
        %647 = vperm.xlu0 %646, %v447
        %v648 = vpop.permute.xlu0 %647
        %v651 = vcombine.high %v645, %v645
        %v653 = vunpack.c.l.s4 1983009808
        %v654 = vunpack.c.0.s8 %v653
        %v655 = vlaneseq
        %v656 = vshrl.u32 %v655, 7
        %v657 = vsub.s32 %v654, %v656
        %v658 = vrot.slane %v645, %v657
        %v660 = vunpack.c.l.s4 1983009808
        %v661 = vunpack.c.0.s8 %v660
        %v662 = vlaneseq
        %v663 = vshrl.u32 %v662, 7
        %v664 = vsub.s32 %v661, %v663
        %v665 = vrot.slane %v651, %v664
        %v666 = vcombine.high %v658, %v658
        %667 = vrot.lane.b32.xlu0 %v658, 98
        %v668 = vpop.permute.xlu0 %667
        %669 = vrot.lane.b32.xlu0 %v666, 98
        %v670 = vpop.permute.xlu0 %669
        %671 = vrot.lane.b32.xlu0 %v665, 98
        %v672 = vpop.permute.xlu0 %671
        %vm673 = vcmask 801792
        %v674 = vsel %vm673, %v668, %v670
        %v675 = vsel %vm673, %v670, %v672
        %v678 = vmul.f32 %v648, %v674
        %v679 = vmul.f32 %v648, %v675
        %v680 = vadd.f32 %v643, %v678
        %v681 = vadd.f32 %v644, %v679
        %v682 = vsel %vm494, 1, 0
        %v683 = vsel %vm495, 1, 0
        %vm684 = vcmp.eq.s32.totalorder %v682, 1
        %vm685 = vcmp.eq.s32.totalorder %v683, 1
        %v686 = vsel %vm684, %v680, 0.0
        %v687 = vsel %vm685, %v681, 0.0
        %v688 = vadd.f32 %v686, 0.0
        %v689 = vadd.f32 %v687, 0.0
        %v690 = vadd.s32 %v486, 4294967295
        %v691 = vadd.s32 %v487, 4294967295
        %vm692 = vcmp.ge.s32.totalorder %v690, 0
        %vm693 = vcmp.ge.s32.totalorder %v691, 0
        %vm694 = vcmp.lt.s32.totalorder %v690, 16
        %vm695 = vcmp.lt.s32.totalorder %v691, 16
        %vm696 = vmand %vm692, %vm694
        %vm697 = vmand %vm693, %vm695
        %v698 = vld [vmem:[#allocation2] sm:$0x3f]
        %699 = vset.pattern.permute.xlu0 1
        %700 = vperm.xlu0 %699, %v447
        %v701 = vpop.permute.xlu0 %700
        %v704 = vcombine.high %v698, %v698
        %v706 = vunpack.c.l.s4 1983009808
        %v707 = vunpack.c.0.s8 %v706
        %v708 = vlaneseq
        %v709 = vshrl.u32 %v708, 7
        %v710 = vsub.s32 %v707, %v709
        %v711 = vrot.slane %v698, %v710
        %v713 = vunpack.c.l.s4 1983009808
        %v714 = vunpack.c.0.s8 %v713
        %v715 = vlaneseq
        %v716 = vshrl.u32 %v715, 7
        %v717 = vsub.s32 %v714, %v716
        %v718 = vrot.slane %v704, %v717
        %v719 = vcombine.high %v711, %v711
        %720 = vrot.lane.b32.xlu0 %v711, 33
        %v721 = vpop.permute.xlu0 %720
        %722 = vrot.lane.b32.xlu0 %v719, 33
        %v723 = vpop.permute.xlu0 %722
        %724 = vrot.lane.b32.xlu0 %v718, 33
        %v725 = vpop.permute.xlu0 %724
        %vm726 = vcmask 269312
        %v727 = vsel %vm726, %v721, %v723
        %v728 = vsel %vm726, %v723, %v725
        %v731 = vmul.f32 %v701, %v727
        %v732 = vmul.f32 %v701, %v728
        %v733 = vadd.f32 %v731, 0.0
        %v734 = vadd.f32 %v732, 0.0
        %v735 = vld [vmem:[#allocation2] sm:$0x3f]
        %736 = vset.pattern.permute.xlu0 6
        %737 = vperm.xlu0 %736, %v447
        %v738 = vpop.permute.xlu0 %737
        %v741 = vcombine.high %v735, %v735
        %v743 = vunpack.c.l.s4 1983009808
        %v744 = vunpack.c.0.s8 %v743
        %v745 = vlaneseq
        %v746 = vshrl.u32 %v745, 7
        %v747 = vsub.s32 %v744, %v746
        %v748 = vrot.slane %v735, %v747
        %v750 = vunpack.c.l.s4 1983009808
        %v751 = vunpack.c.0.s8 %v750
        %v752 = vlaneseq
        %v753 = vshrl.u32 %v752, 7
        %v754 = vsub.s32 %v751, %v753
        %v755 = vrot.slane %v741, %v754
        %v756 = vcombine.high %v748, %v748
        %757 = vrot.lane.b32.xlu0 %v748, 17
        %v758 = vpop.permute.xlu0 %757
        %759 = vrot.lane.b32.xlu0 %v756, 17
        %v760 = vpop.permute.xlu0 %759
        %761 = vrot.lane.b32.xlu0 %v755, 17
        %v762 = vpop.permute.xlu0 %761
        %vm763 = vcmask 138240
        %v764 = vsel %vm763, %v758, %v760
        %v765 = vsel %vm763, %v760, %v762
        %v768 = vmul.f32 %v738, %v764
        %v769 = vmul.f32 %v738, %v765
        %v770 = vadd.f32 %v733, %v768
        %v771 = vadd.f32 %v734, %v769
        %v772 = vld [vmem:[#allocation2] sm:$0x3f]
        %773 = vset.pattern.permute.xlu0 11
        %774 = vperm.xlu0 %773, %v447
        %v775 = vpop.permute.xlu0 %774
        %v778 = vcombine.high %v772, %v772
        %v780 = vunpack.c.l.s4 1983009808
        %v781 = vunpack.c.0.s8 %v780
        %v782 = vlaneseq
        %v783 = vshrl.u32 %v782, 7
        %v784 = vsub.s32 %v781, %v783
        %v785 = vrot.slane %v772, %v784
        %v787 = vunpack.c.l.s4 1983009808
        %v788 = vunpack.c.0.s8 %v787
        %v789 = vlaneseq
        %v790 = vshrl.u32 %v789, 7
        %v791 = vsub.s32 %v788, %v790
        %v792 = vrot.slane %v778, %v791
        %v793 = vcombine.high %v785, %v785
        %794 = vrot.lane.b32.xlu0 %v785, 1
        %v795 = vpop.permute.xlu0 %794
        %796 = vrot.lane.b32.xlu0 %v793, 1
        %v797 = vpop.permute.xlu0 %796
        %798 = vrot.lane.b32.xlu0 %v792, 1
        %v799 = vpop.permute.xlu0 %798
        %vm800 = vcmask 7168
        %v801 = vsel %vm800, %v795, %v797
        %v802 = vsel %vm800, %v797, %v799
        %v805 = vmul.f32 %v775, %v801
        %v806 = vmul.f32 %v775, %v802
        %v807 = vadd.f32 %v770, %v805
        %v808 = vadd.f32 %v771, %v806
        %v809 = vld [vmem:[#allocation2 + $0x2] sm:$0x3f]
        %810 = vset.pattern.permute.xlu0 16
        %811 = vperm.xlu0 %810, %v447
        %v812 = vpop.permute.xlu0 %811
        %v815 = vcombine.high %v809, %v809
        %v817 = vunpack.c.l.s4 1983009808
        %v818 = vunpack.c.0.s8 %v817
        %v819 = vlaneseq
        %v820 = vshrl.u32 %v819, 7
        %v821 = vsub.s32 %v818, %v820
        %v822 = vrot.slane %v809, %v821
        %v824 = vunpack.c.l.s4 1983009808
        %v825 = vunpack.c.0.s8 %v824
        %v826 = vlaneseq
        %v827 = vshrl.u32 %v826, 7
        %v828 = vsub.s32 %v825, %v827
        %v829 = vrot.slane %v815, %v828
        %v830 = vcombine.high %v822, %v822
        %831 = vrot.lane.b32.xlu0 %v822, 113
        %v832 = vpop.permute.xlu0 %831
        %833 = vrot.lane.b32.xlu0 %v830, 113
        %v834 = vpop.permute.xlu0 %833
        %835 = vrot.lane.b32.xlu0 %v829, 113
        %v836 = vpop.permute.xlu0 %835
        %vm837 = vcmask 924672
        %v838 = vsel %vm837, %v832, %v834
        %v839 = vsel %vm837, %v834, %v836
        %v842 = vmul.f32 %v812, %v838
        %v843 = vmul.f32 %v812, %v839
        %v844 = vadd.f32 %v807, %v842
        %v845 = vadd.f32 %v808, %v843
        %v846 = vld [vmem:[#allocation2 + $0x2] sm:$0x3f]
        %847 = vset.pattern.permute.xlu0 21
        %848 = vperm.xlu0 %847, %v447
        %v849 = vpop.permute.xlu0 %848
        %v852 = vcombine.high %v846, %v846
        %v854 = vunpack.c.l.s4 1983009808
        %v855 = vunpack.c.0.s8 %v854
        %v856 = vlaneseq
        %v857 = vshrl.u32 %v856, 7
        %v858 = vsub.s32 %v855, %v857
        %v859 = vrot.slane %v846, %v858
        %v861 = vunpack.c.l.s4 1983009808
        %v862 = vunpack.c.0.s8 %v861
        %v863 = vlaneseq
        %v864 = vshrl.u32 %v863, 7
        %v865 = vsub.s32 %v862, %v864
        %v866 = vrot.slane %v852, %v865
        %v867 = vcombine.high %v859, %v859
        %868 = vrot.lane.b32.xlu0 %v859, 97
        %v869 = vpop.permute.xlu0 %868
        %870 = vrot.lane.b32.xlu0 %v867, 97
        %v871 = vpop.permute.xlu0 %870
        %872 = vrot.lane.b32.xlu0 %v866, 97
        %v873 = vpop.permute.xlu0 %872
        %vm874 = vcmask 793600
        %v875 = vsel %vm874, %v869, %v871
        %v876 = vsel %vm874, %v871, %v873
        %v879 = vmul.f32 %v849, %v875
        %v880 = vmul.f32 %v849, %v876
        %v881 = vadd.f32 %v844, %v879
        %v882 = vadd.f32 %v845, %v880
        %v883 = vsel %vm696, 1, 0
        %v884 = vsel %vm697, 1, 0
        %vm885 = vcmp.eq.s32.totalorder %v883, 1
        %vm886 = vcmp.eq.s32.totalorder %v884, 1
        %v887 = vsel %vm885, %v881, 0.0
        %v888 = vsel %vm886, %v882, 0.0
        %v889 = vadd.f32 %v688, %v887
        %v890 = vadd.f32 %v689, %v888
        %vm891 = vcmp.ge.s32.totalorder %v486, 0
        %vm892 = vcmp.ge.s32.totalorder %v487, 0
        %vm893 = vcmp.lt.s32.totalorder %v486, 16
        %vm894 = vcmp.lt.s32.totalorder %v487, 16
        %vm895 = vmand %vm891, %vm893
        %vm896 = vmand %vm892, %vm894
        %v897 = vld [vmem:[#allocation2] sm:$0x3f]
        %898 = vset.pattern.permute.xlu0 2
        %899 = vperm.xlu0 %898, %v447
        %v900 = vpop.permute.xlu0 %899
        %v903 = vcombine.high %v897, %v897
        %v905 = vunpack.c.l.s4 1983009808
        %v906 = vunpack.c.0.s8 %v905
        %v907 = vlaneseq
        %v908 = vshrl.u32 %v907, 7
        %v909 = vsub.s32 %v906, %v908
        %v910 = vrot.slane %v897, %v909
        %v912 = vunpack.c.l.s4 1983009808
        %v913 = vunpack.c.0.s8 %v912
        %v914 = vlaneseq
        %v915 = vshrl.u32 %v914, 7
        %v916 = vsub.s32 %v913, %v915
        %v917 = vrot.slane %v903, %v916
        %v918 = vcombine.high %v910, %v910
        %919 = vrot.lane.b32.xlu0 %v910, 32
        %v920 = vpop.permute.xlu0 %919
        %921 = vrot.lane.b32.xlu0 %v918, 32
        %v922 = vpop.permute.xlu0 %921
        %923 = vrot.lane.b32.xlu0 %v917, 32
        %v924 = vpop.permute.xlu0 %923
        %vm925 = vcmask 261120
        %v926 = vsel %vm925, %v920, %v922
        %v927 = vsel %vm925, %v922, %v924
        %v930 = vmul.f32 %v900, %v926
        %v931 = vmul.f32 %v900, %v927
        %v932 = vadd.f32 %v930, 0.0
        %v933 = vadd.f32 %v931, 0.0
        %v934 = vld [vmem:[#allocation2] sm:$0x3f]
        %935 = vset.pattern.permute.xlu0 7
        %936 = vperm.xlu0 %935, %v447
        %v937 = vpop.permute.xlu0 %936
        %v940 = vcombine.high %v934, %v934
        %v942 = vunpack.c.l.s4 1983009808
        %v943 = vunpack.c.0.s8 %v942
        %v944 = vlaneseq
        %v945 = vshrl.u32 %v944, 7
        %v946 = vsub.s32 %v943, %v945
        %v947 = vrot.slane %v934, %v946
        %v949 = vunpack.c.l.s4 1983009808
        %v950 = vunpack.c.0.s8 %v949
        %v951 = vlaneseq
        %v952 = vshrl.u32 %v951, 7
        %v953 = vsub.s32 %v950, %v952
        %v954 = vrot.slane %v940, %v953
        %v955 = vcombine.high %v947, %v947
        %956 = vrot.lane.b32.xlu0 %v947, 16
        %v957 = vpop.permute.xlu0 %956
        %958 = vrot.lane.b32.xlu0 %v955, 16
        %v959 = vpop.permute.xlu0 %958
        %960 = vrot.lane.b32.xlu0 %v954, 16
        %v961 = vpop.permute.xlu0 %960
        %vm962 = vcmask 130048
        %v963 = vsel %vm962, %v957, %v959
        %v964 = vsel %vm962, %v959, %v961
        %v967 = vmul.f32 %v937, %v963
        %v968 = vmul.f32 %v937, %v964
        %v969 = vadd.f32 %v932, %v967
        %v970 = vadd.f32 %v933, %v968
        %v971 = vld [vmem:[#allocation2 + $0x2] sm:$0xf]
        %972 = vset.pattern.permute.xlu0 12
        %973 = vperm.xlu0 %972, %v447
        %v974 = vpop.permute.xlu0 %973
        %v978 = vunpack.c.l.s4 1983009808
        %v979 = vunpack.c.0.s8 %v978
        %v980 = vlaneseq
        %v981 = vshrl.u32 %v980, 7
        %v982 = vsub.s32 %v979, %v981
        %v983 = vrot.slane %v971, %v982
        %v984 = vcombine.high %v983, %v983
        %v987 = vmul.f32 %v974, %v983
        %v988 = vmul.f32 %v974, %v984
        %v989 = vadd.f32 %v969, %v987
        %v990 = vadd.f32 %v970, %v988
        %v991 = vld [vmem:[#allocation2 + $0x2] sm:$0x3f]
        %992 = vset.pattern.permute.xlu0 17
        %993 = vperm.xlu0 %992, %v447
        %v994 = vpop.permute.xlu0 %993
        %v997 = vcombine.high %v991, %v991
        %v999 = vunpack.c.l.s4 1983009808
        %v1000 = vunpack.c.0.s8 %v999
        %v1001 = vlaneseq
        %v1002 = vshrl.u32 %v1001, 7
        %v1003 = vsub.s32 %v1000, %v1002
        %v1004 = vrot.slane %v991, %v1003
        %v1006 = vunpack.c.l.s4 1983009808
        %v1007 = vunpack.c.0.s8 %v1006
        %v1008 = vlaneseq
        %v1009 = vshrl.u32 %v1008, 7
        %v1010 = vsub.s32 %v1007, %v1009
        %v1011 = vrot.slane %v997, %v1010
        %v1012 = vcombine.high %v1004, %v1004
        %1013 = vrot.lane.b32.xlu0 %v1004, 112
        %v1014 = vpop.permute.xlu0 %1013
        %1015 = vrot.lane.b32.xlu0 %v1012, 112
        %v1016 = vpop.permute.xlu0 %1015
        %1017 = vrot.lane.b32.xlu0 %v1011, 112
        %v1018 = vpop.permute.xlu0 %1017
        %vm1019 = vcmask 916480
        %v1020 = vsel %vm1019, %v1014, %v1016
        %v1021 = vsel %vm1019, %v1016, %v1018
        %v1024 = vmul.f32 %v994, %v1020
        %v1025 = vmul.f32 %v994, %v1021
        %v1026 = vadd.f32 %v989, %v1024
        %v1027 = vadd.f32 %v990, %v1025
        %v1028 = vld [vmem:[#allocation2 + $0x2] sm:$0x3f]
        %1029 = vset.pattern.permute.xlu0 22
        %1030 = vperm.xlu0 %1029, %v447
        %v1031 = vpop.permute.xlu0 %1030
        %v1034 = vcombine.high %v1028, %v1028
        %v1036 = vunpack.c.l.s4 1983009808
        %v1037 = vunpack.c.0.s8 %v1036
        %v1038 = vlaneseq
        %v1039 = vshrl.u32 %v1038, 7
        %v1040 = vsub.s32 %v1037, %v1039
        %v1041 = vrot.slane %v1028, %v1040
        %v1043 = vunpack.c.l.s4 1983009808
        %v1044 = vunpack.c.0.s8 %v1043
        %v1045 = vlaneseq
        %v1046 = vshrl.u32 %v1045, 7
        %v1047 = vsub.s32 %v1044, %v1046
        %v1048 = vrot.slane %v1034, %v1047
        %v1049 = vcombine.high %v1041, %v1041
        %1050 = vrot.lane.b32.xlu0 %v1041, 96
        %v1051 = vpop.permute.xlu0 %1050
        %1052 = vrot.lane.b32.xlu0 %v1049, 96
        %v1053 = vpop.permute.xlu0 %1052
        %1054 = vrot.lane.b32.xlu0 %v1048, 96
        %v1055 = vpop.permute.xlu0 %1054
        %vm1056 = vcmask 785408
        %v1057 = vsel %vm1056, %v1051, %v1053
        %v1058 = vsel %vm1056, %v1053, %v1055
        %v1061 = vmul.f32 %v1031, %v1057
        %v1062 = vmul.f32 %v1031, %v1058
        %v1063 = vadd.f32 %v1026, %v1061
        %v1064 = vadd.f32 %v1027, %v1062
        %v1065 = vsel %vm895, 1, 0
        %v1066 = vsel %vm896, 1, 0
        %vm1067 = vcmp.eq.s32.totalorder %v1065, 1
        %vm1068 = vcmp.eq.s32.totalorder %v1066, 1
        %v1069 = vsel %vm1067, %v1063, 0.0
        %v1070 = vsel %vm1068, %v1064, 0.0
        %v1071 = vadd.f32 %v889, %v1069
        %v1072 = vadd.f32 %v890, %v1070
        %v1073 = vadd.s32 %v486, 1
        %v1074 = vadd.s32 %v487, 1
        %vm1075 = vcmp.ge.s32.totalorder %v1073, 0
        %vm1076 = vcmp.ge.s32.totalorder %v1074, 0
        %vm1077 = vcmp.lt.s32.totalorder %v1073, 16
        %vm1078 = vcmp.lt.s32.totalorder %v1074, 16
        %vm1079 = vmand %vm1075, %vm1077
        %vm1080 = vmand %vm1076, %vm1078
        %v1081 = vld [vmem:[#allocation2] sm:$0x3f]
        %1082 = vset.pattern.permute.xlu0 3
        %1083 = vperm.xlu0 %1082, %v447
        %v1084 = vpop.permute.xlu0 %1083
        %v1087 = vcombine.high %v1081, %v1081
        %v1089 = vunpack.c.l.s4 1983009808
        %v1090 = vunpack.c.0.s8 %v1089
        %v1091 = vlaneseq
        %v1092 = vshrl.u32 %v1091, 7
        %v1093 = vsub.s32 %v1090, %v1092
        %v1094 = vrot.slane %v1081, %v1093
        %v1096 = vunpack.c.l.s4 1983009808
        %v1097 = vunpack.c.0.s8 %v1096
        %v1098 = vlaneseq
        %v1099 = vshrl.u32 %v1098, 7
        %v1100 = vsub.s32 %v1097, %v1099
        %v1101 = vrot.slane %v1087, %v1100
        %v1102 = vcombine.high %v1094, %v1094
        %1103 = vrot.lane.b32.xlu0 %v1094, 31
        %v1104 = vpop.permute.xlu0 %1103
        %1105 = vrot.lane.b32.xlu0 %v1102, 31
        %v1106 = vpop.permute.xlu0 %1105
        %1107 = vrot.lane.b32.xlu0 %v1101, 31
        %v1108 = vpop.permute.xlu0 %1107
        %vm1109 = vcmask 252928
        %v1110 = vsel %vm1109, %v1104, %v1106
        %v1111 = vsel %vm1109, %v1106, %v1108
        %v1114 = vmul.f32 %v1084, %v1110
        %v1115 = vmul.f32 %v1084, %v1111
        %v1116 = vadd.f32 %v1114, 0.0
        %v1117 = vadd.f32 %v1115, 0.0
        %v1118 = vld [vmem:[#allocation2] sm:$0x3f]
        %1119 = vset.pattern.permute.xlu0 8
        %1120 = vperm.xlu0 %1119, %v447
        %v1121 = vpop.permute.xlu0 %1120
        %v1124 = vcombine.high %v1118, %v1118
        %v1126 = vunpack.c.l.s4 1983009808
        %v1127 = vunpack.c.0.s8 %v1126
        %v1128 = vlaneseq
        %v1129 = vshrl.u32 %v1128, 7
        %v1130 = vsub.s32 %v1127, %v1129
        %v1131 = vrot.slane %v1118, %v1130
        %v1133 = vunpack.c.l.s4 1983009808
        %v1134 = vunpack.c.0.s8 %v1133
        %v1135 = vlaneseq
        %v1136 = vshrl.u32 %v1135, 7
        %v1137 = vsub.s32 %v1134, %v1136
        %v1138 = vrot.slane %v1124, %v1137
        %v1139 = vcombine.high %v1131, %v1131
        %1140 = vrot.lane.b32.xlu0 %v1131, 15
        %v1141 = vpop.permute.xlu0 %1140
        %1142 = vrot.lane.b32.xlu0 %v1139, 15
        %v1143 = vpop.permute.xlu0 %1142
        %1144 = vrot.lane.b32.xlu0 %v1138, 15
        %v1145 = vpop.permute.xlu0 %1144
        %vm1146 = vcmask 121856
        %v1147 = vsel %vm1146, %v1141, %v1143
        %v1148 = vsel %vm1146, %v1143, %v1145
        %v1151 = vmul.f32 %v1121, %v1147
        %v1152 = vmul.f32 %v1121, %v1148
        %v1153 = vadd.f32 %v1116, %v1151
        %v1154 = vadd.f32 %v1117, %v1152
        %v1155 = vld [vmem:[#allocation2 + $0x2] sm:$0x3f]
        %1156 = vset.pattern.permute.xlu0 13
        %1157 = vperm.xlu0 %1156, %v447
        %v1158 = vpop.permute.xlu0 %1157
        %v1161 = vcombine.high %v1155, %v1155
        %v1163 = vunpack.c.l.s4 1983009808
        %v1164 = vunpack.c.0.s8 %v1163
        %v1165 = vlaneseq
        %v1166 = vshrl.u32 %v1165, 7
        %v1167 = vsub.s32 %v1164, %v1166
        %v1168 = vrot.slane %v1155, %v1167
        %v1170 = vunpack.c.l.s4 1983009808
        %v1171 = vunpack.c.0.s8 %v1170
        %v1172 = vlaneseq
        %v1173 = vshrl.u32 %v1172, 7
        %v1174 = vsub.s32 %v1171, %v1173
        %v1175 = vrot.slane %v1161, %v1174
        %v1176 = vcombine.high %v1168, %v1168
        %1177 = vrot.lane.b32.xlu0 %v1168, 127
        %v1178 = vpop.permute.xlu0 %1177
        %1179 = vrot.lane.b32.xlu0 %v1176, 127
        %v1180 = vpop.permute.xlu0 %1179
        %1181 = vrot.lane.b32.xlu0 %v1175, 127
        %v1182 = vpop.permute.xlu0 %1181
        %vm1183 = vcmask 1039360
        %v1184 = vsel %vm1183, %v1178, %v1180
        %v1185 = vsel %vm1183, %v1180, %v1182
        %v1188 = vmul.f32 %v1158, %v1184
        %v1189 = vmul.f32 %v1158, %v1185
        %v1190 = vadd.f32 %v1153, %v1188
        %v1191 = vadd.f32 %v1154, %v1189
        %v1192 = vld [vmem:[#allocation2 + $0x2] sm:$0x3f]
        %1193 = vset.pattern.permute.xlu0 18
        %1194 = vperm.xlu0 %1193, %v447
        %v1195 = vpop.permute.xlu0 %1194
        %v1198 = vcombine.high %v1192, %v1192
        %v1200 = vunpack.c.l.s4 1983009808
        %v1201 = vunpack.c.0.s8 %v1200
        %v1202 = vlaneseq
        %v1203 = vshrl.u32 %v1202, 7
        %v1204 = vsub.s32 %v1201, %v1203
        %v1205 = vrot.slane %v1192, %v1204
        %v1207 = vunpack.c.l.s4 1983009808
        %v1208 = vunpack.c.0.s8 %v1207
        %v1209 = vlaneseq
        %v1210 = vshrl.u32 %v1209, 7
        %v1211 = vsub.s32 %v1208, %v1210
        %v1212 = vrot.slane %v1198, %v1211
        %v1213 = vcombine.high %v1205, %v1205
        %1214 = vrot.lane.b32.xlu0 %v1205, 111
        %v1215 = vpop.permute.xlu0 %1214
        %1216 = vrot.lane.b32.xlu0 %v1213, 111
        %v1217 = vpop.permute.xlu0 %1216
        %1218 = vrot.lane.b32.xlu0 %v1212, 111
        %v1219 = vpop.permute.xlu0 %1218
        %vm1220 = vcmask 908288
        %v1221 = vsel %vm1220, %v1215, %v1217
        %v1222 = vsel %vm1220, %v1217, %v1219
        %v1225 = vmul.f32 %v1195, %v1221
        %v1226 = vmul.f32 %v1195, %v1222
        %v1227 = vadd.f32 %v1190, %v1225
        %v1228 = vadd.f32 %v1191, %v1226
        %v1229 = vld [vmem:[#allocation2 + $0x2] sm:$0x3f]
        %1230 = vset.pattern.permute.xlu0 23
        %1231 = vperm.xlu0 %1230, %v447
        %v1232 = vpop.permute.xlu0 %1231
        %v1235 = vcombine.high %v1229, %v1229
        %v1237 = vunpack.c.l.s4 1983009808
        %v1238 = vunpack.c.0.s8 %v1237
        %v1239 = vlaneseq
        %v1240 = vshrl.u32 %v1239, 7
        %v1241 = vsub.s32 %v1238, %v1240
        %v1242 = vrot.slane %v1229, %v1241
        %v1244 = vunpack.c.l.s4 1983009808
        %v1245 = vunpack.c.0.s8 %v1244
        %v1246 = vlaneseq
        %v1247 = vshrl.u32 %v1246, 7
        %v1248 = vsub.s32 %v1245, %v1247
        %v1249 = vrot.slane %v1235, %v1248
        %v1250 = vcombine.high %v1242, %v1242
        %1251 = vrot.lane.b32.xlu0 %v1242, 95
        %v1252 = vpop.permute.xlu0 %1251
        %1253 = vrot.lane.b32.xlu0 %v1250, 95
        %v1254 = vpop.permute.xlu0 %1253
        %1255 = vrot.lane.b32.xlu0 %v1249, 95
        %v1256 = vpop.permute.xlu0 %1255
        %vm1257 = vcmask 777216
        %v1258 = vsel %vm1257, %v1252, %v1254
        %v1259 = vsel %vm1257, %v1254, %v1256
        %v1262 = vmul.f32 %v1232, %v1258
        %v1263 = vmul.f32 %v1232, %v1259
        %v1264 = vadd.f32 %v1227, %v1262
        %v1265 = vadd.f32 %v1228, %v1263
        %v1266 = vsel %vm1079, 1, 0
        %v1267 = vsel %vm1080, 1, 0
        %vm1268 = vcmp.eq.s32.totalorder %v1266, 1
        %vm1269 = vcmp.eq.s32.totalorder %v1267, 1
        %v1270 = vsel %vm1268, %v1264, 0.0
        %v1271 = vsel %vm1269, %v1265, 0.0
        %v1272 = vadd.f32 %v1071, %v1270
        %v1273 = vadd.f32 %v1072, %v1271
        %v1274 = vadd.s32 %v486, 2
        %v1275 = vadd.s32 %v487, 2
        %vm1276 = vcmp.ge.s32.totalorder %v1274, 0
        %vm1277 = vcmp.ge.s32.totalorder %v1275, 0
        %vm1278 = vcmp.lt.s32.totalorder %v1274, 16
        %vm1279 = vcmp.lt.s32.totalorder %v1275, 16
        %vm1280 = vmand %vm1276, %vm1278
        %vm1281 = vmand %vm1277, %vm1279
        %v1282 = vld [vmem:[#allocation2] sm:$0x3f]
        %1283 = vset.pattern.permute.xlu0 4
        %1284 = vperm.xlu0 %1283, %v447
        %v1285 = vpop.permute.xlu0 %1284
        %v1288 = vcombine.high %v1282, %v1282
        %v1290 = vunpack.c.l.s4 1983009808
        %v1291 = vunpack.c.0.s8 %v1290
        %v1292 = vlaneseq
        %v1293 = vshrl.u32 %v1292, 7
        %v1294 = vsub.s32 %v1291, %v1293
        %v1295 = vrot.slane %v1282, %v1294
        %v1297 = vunpack.c.l.s4 1983009808
        %v1298 = vunpack.c.0.s8 %v1297
        %v1299 = vlaneseq
        %v1300 = vshrl.u32 %v1299, 7
        %v1301 = vsub.s32 %v1298, %v1300
        %v1302 = vrot.slane %v1288, %v1301
        %v1303 = vcombine.high %v1295, %v1295
        %1304 = vrot.lane.b32.xlu0 %v1295, 30
        %v1305 = vpop.permute.xlu0 %1304
        %1306 = vrot.lane.b32.xlu0 %v1303, 30
        %v1307 = vpop.permute.xlu0 %1306
        %1308 = vrot.lane.b32.xlu0 %v1302, 30
        %v1309 = vpop.permute.xlu0 %1308
        %vm1310 = vcmask 244736
        %v1311 = vsel %vm1310, %v1305, %v1307
        %v1312 = vsel %vm1310, %v1307, %v1309
        %v1315 = vmul.f32 %v1285, %v1311
        %v1316 = vmul.f32 %v1285, %v1312
        %v1317 = vadd.f32 %v1315, 0.0
        %v1318 = vadd.f32 %v1316, 0.0
        %v1319 = vld [vmem:[#allocation2] sm:$0x3f]
        %1320 = vset.pattern.permute.xlu0 9
        %1321 = vperm.xlu0 %1320, %v447
        %v1322 = vpop.permute.xlu0 %1321
        %v1325 = vcombine.high %v1319, %v1319
        %v1327 = vunpack.c.l.s4 1983009808
        %v1328 = vunpack.c.0.s8 %v1327
        %v1329 = vlaneseq
        %v1330 = vshrl.u32 %v1329, 7
        %v1331 = vsub.s32 %v1328, %v1330
        %v1332 = vrot.slane %v1319, %v1331
        %v1334 = vunpack.c.l.s4 1983009808
        %v1335 = vunpack.c.0.s8 %v1334
        %v1336 = vlaneseq
        %v1337 = vshrl.u32 %v1336, 7
        %v1338 = vsub.s32 %v1335, %v1337
        %v1339 = vrot.slane %v1325, %v1338
        %v1340 = vcombine.high %v1332, %v1332
        %1341 = vrot.lane.b32.xlu0 %v1332, 14
        %v1342 = vpop.permute.xlu0 %1341
        %1343 = vrot.lane.b32.xlu0 %v1340, 14
        %v1344 = vpop.permute.xlu0 %1343
        %1345 = vrot.lane.b32.xlu0 %v1339, 14
        %v1346 = vpop.permute.xlu0 %1345
        %vm1347 = vcmask 113664
        %v1348 = vsel %vm1347, %v1342, %v1344
        %v1349 = vsel %vm1347, %v1344, %v1346
        %v1352 = vmul.f32 %v1322, %v1348
        %v1353 = vmul.f32 %v1322, %v1349
        %v1354 = vadd.f32 %v1317, %v1352
        %v1355 = vadd.f32 %v1318, %v1353
        %v1356 = vld [vmem:[#allocation2 + $0x2] sm:$0x3f]
        %1357 = vset.pattern.permute.xlu0 14
        %1358 = vperm.xlu0 %1357, %v447
        %v1359 = vpop.permute.xlu0 %1358
        %v1362 = vcombine.high %v1356, %v1356
        %v1364 = vunpack.c.l.s4 1983009808
        %v1365 = vunpack.c.0.s8 %v1364
        %v1366 = vlaneseq
        %v1367 = vshrl.u32 %v1366, 7
        %v1368 = vsub.s32 %v1365, %v1367
        %v1369 = vrot.slane %v1356, %v1368
        %v1371 = vunpack.c.l.s4 1983009808
        %v1372 = vunpack.c.0.s8 %v1371
        %v1373 = vlaneseq
        %v1374 = vshrl.u32 %v1373, 7
        %v1375 = vsub.s32 %v1372, %v1374
        %v1376 = vrot.slane %v1362, %v1375
        %v1377 = vcombine.high %v1369, %v1369
        %1378 = vrot.lane.b32.xlu0 %v1369, 126
        %v1379 = vpop.permute.xlu0 %1378
        %1380 = vrot.lane.b32.xlu0 %v1377, 126
        %v1381 = vpop.permute.xlu0 %1380
        %1382 = vrot.lane.b32.xlu0 %v1376, 126
        %v1383 = vpop.permute.xlu0 %1382
        %vm1384 = vcmask 1031168
        %v1385 = vsel %vm1384, %v1379, %v1381
        %v1386 = vsel %vm1384, %v1381, %v1383
        %v1389 = vmul.f32 %v1359, %v1385
        %v1390 = vmul.f32 %v1359, %v1386
        %v1391 = vadd.f32 %v1354, %v1389
        %v1392 = vadd.f32 %v1355, %v1390
        %v1393 = vld [vmem:[#allocation2 + $0x2] sm:$0x3f]
        %1394 = vset.pattern.permute.xlu0 19
        %1395 = vperm.xlu0 %1394, %v447
        %v1396 = vpop.permute.xlu0 %1395
        %v1399 = vcombine.high %v1393, %v1393
        %v1401 = vunpack.c.l.s4 1983009808
        %v1402 = vunpack.c.0.s8 %v1401
        %v1403 = vlaneseq
        %v1404 = vshrl.u32 %v1403, 7
        %v1405 = vsub.s32 %v1402, %v1404
        %v1406 = vrot.slane %v1393, %v1405
        %v1408 = vunpack.c.l.s4 1983009808
        %v1409 = vunpack.c.0.s8 %v1408
        %v1410 = vlaneseq
        %v1411 = vshrl.u32 %v1410, 7
        %v1412 = vsub.s32 %v1409, %v1411
        %v1413 = vrot.slane %v1399, %v1412
        %v1414 = vcombine.high %v1406, %v1406
        %1415 = vrot.lane.b32.xlu0 %v1406, 110
        %v1416 = vpop.permute.xlu0 %1415
        %1417 = vrot.lane.b32.xlu0 %v1414, 110
        %v1418 = vpop.permute.xlu0 %1417
        %1419 = vrot.lane.b32.xlu0 %v1413, 110
        %v1420 = vpop.permute.xlu0 %1419
        %vm1421 = vcmask 900096
        %v1422 = vsel %vm1421, %v1416, %v1418
        %v1423 = vsel %vm1421, %v1418, %v1420
        %v1426 = vmul.f32 %v1396, %v1422
        %v1427 = vmul.f32 %v1396, %v1423
        %v1428 = vadd.f32 %v1391, %v1426
        %v1429 = vadd.f32 %v1392, %v1427
        %v1430 = vld [vmem:[#allocation2 + $0x2] sm:$0x3f]
        %1431 = vset.pattern.permute.xlu0 24
        %1432 = vperm.xlu0 %1431, %v447
        %v1433 = vpop.permute.xlu0 %1432
        %v1436 = vcombine.high %v1430, %v1430
        %v1438 = vunpack.c.l.s4 1983009808
        %v1439 = vunpack.c.0.s8 %v1438
        %v1440 = vlaneseq
        %v1441 = vshrl.u32 %v1440, 7
        %v1442 = vsub.s32 %v1439, %v1441
        %v1443 = vrot.slane %v1430, %v1442
        %v1445 = vunpack.c.l.s4 1983009808
        %v1446 = vunpack.c.0.s8 %v1445
        %v1447 = vlaneseq
        %v1448 = vshrl.u32 %v1447, 7
        %v1449 = vsub.s32 %v1446, %v1448
        %v1450 = vrot.slane %v1436, %v1449
        %v1451 = vcombine.high %v1443, %v1443
        %1452 = vrot.lane.b32.xlu0 %v1443, 94
        %v1453 = vpop.permute.xlu0 %1452
        %1454 = vrot.lane.b32.xlu0 %v1451, 94
        %v1455 = vpop.permute.xlu0 %1454
        %1456 = vrot.lane.b32.xlu0 %v1450, 94
        %v1457 = vpop.permute.xlu0 %1456
        %vm1458 = vcmask 769024
        %v1459 = vsel %vm1458, %v1453, %v1455
        %v1460 = vsel %vm1458, %v1455, %v1457
        %v1463 = vmul.f32 %v1433, %v1459
        %v1464 = vmul.f32 %v1433, %v1460
        %v1465 = vadd.f32 %v1428, %v1463
        %v1466 = vadd.f32 %v1429, %v1464
        %v1467 = vsel %vm1280, 1, 0
        %v1468 = vsel %vm1281, 1, 0
        %vm1469 = vcmp.eq.s32.totalorder %v1467, 1
        %vm1470 = vcmp.eq.s32.totalorder %v1468, 1
        %v1471 = vsel %vm1469, %v1465, 0.0
        %v1472 = vsel %vm1470, %v1466, 0.0
        %v1473 = vadd.f32 %v1272, %v1471
        %v1474 = vadd.f32 %v1273, %v1472
        %v1475 = vld [vmem:[%s4] sm:$0x3]
        %1477 = vset.pattern.permute.xlu0 0
        %1478 = vperm.xlu0 %1477, %v1475
        %v1479 = vpop.permute.xlu0 %1478
        %v1481 = vadd.f32 %v1473, %v1479
        %v1482 = vadd.f32 %v1474, %v1479
        %v1483 = vxor.u32 %v1481, 2147483648
        %v1484 = vxor.u32 %v1482, 2147483648
        %v1485 = vmul.f32 %v1483, 1.442695
        %v1486 = vpow.pop %v1485
        %v1487 = vmul.f32 %v1484, 1.442695
        %v1488 = vpow.pop %v1487
        %v1489 = vadd.f32 %v1486, 1.0
        %v1490 = vadd.f32 %v1488, 1.0
        %v1491 = vrcp.pop %v1489
        %v1492 = vmul.f32 1.0, %v1491
        %v1493 = vrcp.pop %v1490
        %v1494 = vmul.f32 1.0, %v1493
        %v1495 = vmul.f32 %v1481, %v1492
        %v1496 = vmul.f32 %v1482, %v1494
        %v1497 = vld [vmem:[%s5] sm:$0xf]
        %1499 = vrot.lane.b32.xlu0 %v1497, 126
        %v1500 = vpop.permute.xlu0 %1499
        %v1501 = vsel %vm599, %v1500, 0
        %vm1503 = vcmask 1041408
        %v1505 = vsel %vm1503, %v1495, 0
        %v1508 = vsel %vm1503, %v1496, 0
        %1510 = vmatprep.subr.mxu0 %v1508
        %1511 = vmatpush1.msra.mxu0 %v1505
        %1512 = vmatprep.subr.mxu0 0.0
        %1513 = vmatpush1.msra.mxu0 0.0
        %1514 = vmatprep.subr.mxu0 0.0
        %1515 = vmatpush1.msra.mxu0 0.0
        %1516 = vmatprep.subr.mxu0 0.0
        %1517 = vmatpush1.msra.mxu0 0.0
        %1518 = vmatprep.subr.mxu0 0.0
        %1519 = vmatpush1.msra.mxu0 0.0
        %1520 = vmatprep.subr.mxu0 0.0
        %1521 = vmatpush1.msra.mxu0 0.0
        %1522 = vmatprep.subr.mxu0 0.0
        %1523 = vmatpush1.msra.mxu0 0.0
        %1524 = vmatprep.subr.mxu0 0.0
        %1525 = vmatpush1.msra.mxu0 0.0
        %1526 = vmatprep.subr.mxu0 0.0
        %1527 = vmatpush1.msra.mxu0 0.0
        %1528 = vmatprep.subr.mxu0 0.0
        %1529 = vmatpush1.msra.mxu0 0.0
        %1530 = vmatprep.subr.mxu0 0.0
        %1531 = vmatpush1.msra.mxu0 0.0
        %1532 = vmatprep.subr.mxu0 0.0
        %1533 = vmatpush1.msra.mxu0 0.0
        %1534 = vmatprep.subr.mxu0 0.0
        %1535 = vmatpush1.msra.mxu0 0.0
        %1536 = vmatprep.subr.mxu0 0.0
        %1537 = vmatpush1.msra.mxu0 0.0
        %1538 = vmatprep.subr.mxu0 0.0
        %1539 = vmatpush1.msra.mxu0 0.0
        %1540 = vmatprep.subr.mxu0 0.0
        %1541 = vmatpush1.msra.mxu0 0.0
        %1542 = vmatprep.subr.mxu0 0.0
        %1543 = vmatpush1.msra.mxu0 0.0
        %1544 = vmatprep.subr.mxu0 0.0
        %1545 = vmatpush1.msra.mxu0 0.0
        %1546 = vmatprep.subr.mxu0 0.0
        %1547 = vmatpush1.msra.mxu0 0.0
        %1548 = vmatprep.subr.mxu0 0.0
        %1549 = vmatpush1.msra.mxu0 0.0
        %1550 = vmatprep.subr.mxu0 0.0
        %1551 = vmatpush1.msra.mxu0 0.0
        %1552 = vmatprep.subr.mxu0 0.0
        %1553 = vmatpush1.msra.mxu0 0.0
        %1554 = vmatprep.subr.mxu0 0.0
        %1555 = vmatpush1.msra.mxu0 0.0
        %1556 = vmatprep.subr.mxu0 0.0
        %1557 = vmatpush1.msra.mxu0 0.0
        %1558 = vmatprep.subr.mxu0 0.0
        %1559 = vmatpush1.msra.mxu0 0.0
        %1560 = vmatprep.subr.mxu0 0.0
        %1561 = vmatpush1.msra.mxu0 0.0
        %1562 = vmatprep.subr.mxu0 0.0
        %1563 = vmatpush1.msra.mxu0 0.0
        %1564 = vmatprep.subr.mxu0 0.0
        %1565 = vmatpush1.msra.mxu0 0.0
        %1566 = vmatprep.subr.mxu0 0.0
        %1567 = vmatpush1.msra.mxu0 0.0
        %1568 = vmatprep.subr.mxu0 0.0
        %1569 = vmatpush1.msra.mxu0 0.0
        %1570 = vmatprep.subr.mxu0 0.0
        %1571 = vmatpush1.msra.mxu0 0.0
        %1572 = vmatprep.subr.mxu0 0.0
        %1573 = vmatpush1.msra.mxu0 0.0
        %1574 = vmatprep.mubr.f32.mxu0 0.0
        %1575 = vmatmul.mubr.f32.gmra.mrb[0].mxu0 %v1501
        %v1576 = vpop.f32.mrb[0].mxu0
        %v1577 = vadd.f32 0.0, %v1576
        %v1578 = vpop.f32.mrb[0].mxu0
        %v1579 = vadd.f32 0.0, %v1578
        %1580 = vdwg.mxu0
        %v1581 = vsel %vm599, %v1497, 0
        %v1583 = vsel %vm1503, %v445, 0
        %v1585 = vsel %vm1503, %v446, 0
        %1587 = vmatprep.subr.mxu0 %v1585
        %1588 = vmatpush1.msra.mxu0 %v1583
        %1589 = vmatprep.subr.mxu0 0.0
        %1590 = vmatpush1.msra.mxu0 0.0
        %1591 = vmatprep.subr.mxu0 0.0
        %1592 = vmatpush1.msra.mxu0 0.0
        %1593 = vmatprep.subr.mxu0 0.0
        %1594 = vmatpush1.msra.mxu0 0.0
        %1595 = vmatprep.subr.mxu0 0.0
        %1596 = vmatpush1.msra.mxu0 0.0
        %1597 = vmatprep.subr.mxu0 0.0
        %1598 = vmatpush1.msra.mxu0 0.0
        %1599 = vmatprep.subr.mxu0 0.0
        %1600 = vmatpush1.msra.mxu0 0.0
        %1601 = vmatprep.subr.mxu0 0.0
        %1602 = vmatpush1.msra.mxu0 0.0
        %1603 = vmatprep.subr.mxu0 0.0
        %1604 = vmatpush1.msra.mxu0 0.0
        %1605 = vmatprep.subr.mxu0 0.0
        %1606 = vmatpush1.msra.mxu0 0.0
        %1607 = vmatprep.subr.mxu0 0.0
        %1608 = vmatpush1.msra.mxu0 0.0
        %1609 = vmatprep.subr.mxu0 0.0
        %1610 = vmatpush1.msra.mxu0 0.0
        %1611 = vmatprep.subr.mxu0 0.0
        %1612 = vmatpush1.msra.mxu0 0.0
        %1613 = vmatprep.subr.mxu0 0.0
        %1614 = vmatpush1.msra.mxu0 0.0
        %1615 = vmatprep.subr.mxu0 0.0
        %1616 = vmatpush1.msra.mxu0 0.0
        %1617 = vmatprep.subr.mxu0 0.0
        %1618 = vmatpush1.msra.mxu0 0.0
        %1619 = vmatprep.subr.mxu0 0.0
        %1620 = vmatpush1.msra.mxu0 0.0
        %1621 = vmatprep.subr.mxu0 0.0
        %1622 = vmatpush1.msra.mxu0 0.0
        %1623 = vmatprep.subr.mxu0 0.0
        %1624 = vmatpush1.msra.mxu0 0.0
        %1625 = vmatprep.subr.mxu0 0.0
        %1626 = vmatpush1.msra.mxu0 0.0
        %1627 = vmatprep.subr.mxu0 0.0
        %1628 = vmatpush1.msra.mxu0 0.0
        %1629 = vmatprep.subr.mxu0 0.0
        %1630 = vmatpush1.msra.mxu0 0.0
        %1631 = vmatprep.subr.mxu0 0.0
        %1632 = vmatpush1.msra.mxu0 0.0
        %1633 = vmatprep.subr.mxu0 0.0
        %1634 = vmatpush1.msra.mxu0 0.0
        %1635 = vmatprep.subr.mxu0 0.0
        %1636 = vmatpush1.msra.mxu0 0.0
        %1637 = vmatprep.subr.mxu0 0.0
        %1638 = vmatpush1.msra.mxu0 0.0
        %1639 = vmatprep.subr.mxu0 0.0
        %1640 = vmatpush1.msra.mxu0 0.0
        %1641 = vmatprep.subr.mxu0 0.0
        %1642 = vmatpush1.msra.mxu0 0.0
        %1643 = vmatprep.subr.mxu0 0.0
        %1644 = vmatpush1.msra.mxu0 0.0
        %1645 = vmatprep.subr.mxu0 0.0
        %1646 = vmatpush1.msra.mxu0 0.0
        %1647 = vmatprep.subr.mxu0 0.0
        %1648 = vmatpush1.msra.mxu0 0.0
        %1649 = vmatprep.subr.mxu0 0.0
        %1650 = vmatpush1.msra.mxu0 0.0
        %1651 = vmatprep.mubr.f32.mxu0 0.0
        %1652 = vmatmul.mubr.f32.gmra.mrb[0].mxu0 %v1581
        %v1653 = vpop.f32.mrb[0].mxu0
        %v1654 = vadd.f32 %v1577, %v1653
        %v1655 = vpop.f32.mrb[0].mxu0
        %v1656 = vadd.f32 %v1579, %v1655
        %1657 = vdwg.mxu0
        %v1658 = vld [vmem:[%s6] sm:$0xf]
        %1660 = vset.pattern.permute.xlu0 0
        %1661 = vperm.xlu0 %1660, %v1658
        %v1662 = vpop.permute.xlu0 %1661
        %v1664 = vadd.f32 %v1654, %v1662
        %v1665 = vadd.f32 %v1656, %v1662
        %v1666 = vld [vmem:[%s7] sm:$0xf]
        %1667 = vst [vmem:[#allocation3] sm:$0xff] 0.0
        %1668 = vst [vmem:[#allocation3 + $0x8] sm:$0xff] 0.0
        %v1671 = vcombine.low %v1664, %v1665
        %1673 = vst [vmem:[#allocation3 + $0x4] sm:$0xff] %v1671
        %v1674 = vld [vmem:[#allocation3] sm:$0xff]
        %v1675 = vld [vmem:[#allocation3 + $0x8] sm:$0xf]
        %1677 = vset.pattern.permute.xlu0 0
        %1678 = vperm.xlu0 %1677, %v1666
        %v1679 = vpop.permute.xlu0 %1678
        %v1683 = vcombine.high %v1674, %v1674
        %1684 = vrot.lane.b32.xlu0 %v1674, 34
        %v1685 = vpop.permute.xlu0 %1684
        %1686 = vrot.lane.b32.xlu0 %v1683, 34
        %v1687 = vpop.permute.xlu0 %1686
        %1688 = vrot.lane.b32.xlu0 %v1675, 34
        %v1689 = vpop.permute.xlu0 %1688
        %v1690 = vsel %vm525, %v1685, %v1687
        %v1691 = vsel %vm525, %v1687, %v1689
        %v1694 = vmul.f32 %v1679, %v1690
        %v1695 = vmul.f32 %v1679, %v1691
        %v1696 = vadd.f32 %v1694, 0.0
        %v1697 = vadd.f32 %v1695, 0.0
        %v1698 = vld [vmem:[#allocation3] sm:$0xff]
        %v1699 = vld [vmem:[#allocation3 + $0x8] sm:$0xf]
        %1700 = vset.pattern.permute.xlu0 5
        %1701 = vperm.xlu0 %1700, %v1666
        %v1702 = vpop.permute.xlu0 %1701
        %v1706 = vcombine.high %v1698, %v1698
        %1707 = vrot.lane.b32.xlu0 %v1698, 18
        %v1708 = vpop.permute.xlu0 %1707
        %1709 = vrot.lane.b32.xlu0 %v1706, 18
        %v1710 = vpop.permute.xlu0 %1709
        %1711 = vrot.lane.b32.xlu0 %v1699, 18
        %v1712 = vpop.permute.xlu0 %1711
        %v1713 = vsel %vm562, %v1708, %v1710
        %v1714 = vsel %vm562, %v1710, %v1712
        %v1717 = vmul.f32 %v1702, %v1713
        %v1718 = vmul.f32 %v1702, %v1714
        %v1719 = vadd.f32 %v1696, %v1717
        %v1720 = vadd.f32 %v1697, %v1718
        %v1721 = vld [vmem:[#allocation3] sm:$0xff]
        %v1722 = vld [vmem:[#allocation3 + $0x8] sm:$0xf]
        %1723 = vset.pattern.permute.xlu0 10
        %1724 = vperm.xlu0 %1723, %v1666
        %v1725 = vpop.permute.xlu0 %1724
        %v1729 = vcombine.high %v1721, %v1721
        %1730 = vrot.lane.b32.xlu0 %v1721, 2
        %v1731 = vpop.permute.xlu0 %1730
        %1732 = vrot.lane.b32.xlu0 %v1729, 2
        %v1733 = vpop.permute.xlu0 %1732
        %1734 = vrot.lane.b32.xlu0 %v1722, 2
        %v1735 = vpop.permute.xlu0 %1734
        %v1736 = vsel %vm599, %v1731, %v1733
        %v1737 = vsel %vm599, %v1733, %v1735
        %v1740 = vmul.f32 %v1725, %v1736
        %v1741 = vmul.f32 %v1725, %v1737
        %v1742 = vadd.f32 %v1719, %v1740
        %v1743 = vadd.f32 %v1720, %v1741
        %v1744 = vld [vmem:[#allocation3 + $0x4] sm:$0xff]
        %v1745 = vld [vmem:[#allocation3 + $0xc] sm:$0xf]
        %1746 = vset.pattern.permute.xlu0 15
        %1747 = vperm.xlu0 %1746, %v1666
        %v1748 = vpop.permute.xlu0 %1747
        %v1752 = vcombine.high %v1744, %v1744
        %1753 = vrot.lane.b32.xlu0 %v1744, 114
        %v1754 = vpop.permute.xlu0 %1753
        %1755 = vrot.lane.b32.xlu0 %v1752, 114
        %v1756 = vpop.permute.xlu0 %1755
        %1757 = vrot.lane.b32.xlu0 %v1745, 114
        %v1758 = vpop.permute.xlu0 %1757
        %v1759 = vsel %vm636, %v1754, %v1756
        %v1760 = vsel %vm636, %v1756, %v1758
        %v1763 = vmul.f32 %v1748, %v1759
        %v1764 = vmul.f32 %v1748, %v1760
        %v1765 = vadd.f32 %v1742, %v1763
        %v1766 = vadd.f32 %v1743, %v1764
        %v1767 = vld [vmem:[#allocation3 + $0x4] sm:$0xff]
        %v1768 = vld [vmem:[#allocation3 + $0xc] sm:$0xf]
        %1769 = vset.pattern.permute.xlu0 20
        %1770 = vperm.xlu0 %1769, %v1666
        %v1771 = vpop.permute.xlu0 %1770
        %v1775 = vcombine.high %v1767, %v1767
        %1776 = vrot.lane.b32.xlu0 %v1767, 98
        %v1777 = vpop.permute.xlu0 %1776
        %1778 = vrot.lane.b32.xlu0 %v1775, 98
        %v1779 = vpop.permute.xlu0 %1778
        %1780 = vrot.lane.b32.xlu0 %v1768, 98
        %v1781 = vpop.permute.xlu0 %1780
        %v1782 = vsel %vm673, %v1777, %v1779
        %v1783 = vsel %vm673, %v1779, %v1781
        %v1786 = vmul.f32 %v1771, %v1782
        %v1787 = vmul.f32 %v1771, %v1783
        %v1788 = vadd.f32 %v1765, %v1786
        %v1789 = vadd.f32 %v1766, %v1787
        %v1790 = vsel %vm684, %v1788, 0.0
        %v1791 = vsel %vm685, %v1789, 0.0
        %v1792 = vadd.f32 %v1790, 0.0
        %v1793 = vadd.f32 %v1791, 0.0
        %v1794 = vld [vmem:[#allocation3] sm:$0xff]
        %v1795 = vld [vmem:[#allocation3 + $0x8] sm:$0xf]
        %1796 = vset.pattern.permute.xlu0 1
        %1797 = vperm.xlu0 %1796, %v1666
        %v1798 = vpop.permute.xlu0 %1797
        %v1802 = vcombine.high %v1794, %v1794
        %1803 = vrot.lane.b32.xlu0 %v1794, 33
        %v1804 = vpop.permute.xlu0 %1803
        %1805 = vrot.lane.b32.xlu0 %v1802, 33
        %v1806 = vpop.permute.xlu0 %1805
        %1807 = vrot.lane.b32.xlu0 %v1795, 33
        %v1808 = vpop.permute.xlu0 %1807
        %v1809 = vsel %vm726, %v1804, %v1806
        %v1810 = vsel %vm726, %v1806, %v1808
        %v1813 = vmul.f32 %v1798, %v1809
        %v1814 = vmul.f32 %v1798, %v1810
        %v1815 = vadd.f32 %v1813, 0.0
        %v1816 = vadd.f32 %v1814, 0.0
        %v1817 = vld [vmem:[#allocation3] sm:$0xff]
        %v1818 = vld [vmem:[#allocation3 + $0x8] sm:$0xf]
        %1819 = vset.pattern.permute.xlu0 6
        %1820 = vperm.xlu0 %1819, %v1666
        %v1821 = vpop.permute.xlu0 %1820
        %v1825 = vcombine.high %v1817, %v1817
        %1826 = vrot.lane.b32.xlu0 %v1817, 17
        %v1827 = vpop.permute.xlu0 %1826
        %1828 = vrot.lane.b32.xlu0 %v1825, 17
        %v1829 = vpop.permute.xlu0 %1828
        %1830 = vrot.lane.b32.xlu0 %v1818, 17
        %v1831 = vpop.permute.xlu0 %1830
        %v1832 = vsel %vm763, %v1827, %v1829
        %v1833 = vsel %vm763, %v1829, %v1831
        %v1836 = vmul.f32 %v1821, %v1832
        %v1837 = vmul.f32 %v1821, %v1833
        %v1838 = vadd.f32 %v1815, %v1836
        %v1839 = vadd.f32 %v1816, %v1837
        %v1840 = vld [vmem:[#allocation3] sm:$0xff]
        %v1841 = vld [vmem:[#allocation3 + $0x8] sm:$0xf]
        %1842 = vset.pattern.permute.xlu0 11
        %1843 = vperm.xlu0 %1842, %v1666
        %v1844 = vpop.permute.xlu0 %1843
        %v1848 = vcombine.high %v1840, %v1840
        %1849 = vrot.lane.b32.xlu0 %v1840, 1
        %v1850 = vpop.permute.xlu0 %1849
        %1851 = vrot.lane.b32.xlu0 %v1848, 1
        %v1852 = vpop.permute.xlu0 %1851
        %1853 = vrot.lane.b32.xlu0 %v1841, 1
        %v1854 = vpop.permute.xlu0 %1853
        %v1855 = vsel %vm800, %v1850, %v1852
        %v1856 = vsel %vm800, %v1852, %v1854
        %v1859 = vmul.f32 %v1844, %v1855
        %v1860 = vmul.f32 %v1844, %v1856
        %v1861 = vadd.f32 %v1838, %v1859
        %v1862 = vadd.f32 %v1839, %v1860
        %v1863 = vld [vmem:[#allocation3 + $0x4] sm:$0xff]
        %v1864 = vld [vmem:[#allocation3 + $0xc] sm:$0xf]
        %1865 = vset.pattern.permute.xlu0 16
        %1866 = vperm.xlu0 %1865, %v1666
        %v1867 = vpop.permute.xlu0 %1866
        %v1871 = vcombine.high %v1863, %v1863
        %1872 = vrot.lane.b32.xlu0 %v1863, 113
        %v1873 = vpop.permute.xlu0 %1872
        %1874 = vrot.lane.b32.xlu0 %v1871, 113
        %v1875 = vpop.permute.xlu0 %1874
        %1876 = vrot.lane.b32.xlu0 %v1864, 113
        %v1877 = vpop.permute.xlu0 %1876
        %v1878 = vsel %vm837, %v1873, %v1875
        %v1879 = vsel %vm837, %v1875, %v1877
        %v1882 = vmul.f32 %v1867, %v1878
        %v1883 = vmul.f32 %v1867, %v1879
        %v1884 = vadd.f32 %v1861, %v1882
        %v1885 = vadd.f32 %v1862, %v1883
        %v1886 = vld [vmem:[#allocation3 + $0x4] sm:$0xff]
        %v1887 = vld [vmem:[#allocation3 + $0xc] sm:$0xf]
        %1888 = vset.pattern.permute.xlu0 21
        %1889 = vperm.xlu0 %1888, %v1666
        %v1890 = vpop.permute.xlu0 %1889
        %v1894 = vcombine.high %v1886, %v1886
        %1895 = vrot.lane.b32.xlu0 %v1886, 97
        %v1896 = vpop.permute.xlu0 %1895
        %1897 = vrot.lane.b32.xlu0 %v1894, 97
        %v1898 = vpop.permute.xlu0 %1897
        %1899 = vrot.lane.b32.xlu0 %v1887, 97
        %v1900 = vpop.permute.xlu0 %1899
        %v1901 = vsel %vm874, %v1896, %v1898
        %v1902 = vsel %vm874, %v1898, %v1900
        %v1905 = vmul.f32 %v1890, %v1901
        %v1906 = vmul.f32 %v1890, %v1902
        %v1907 = vadd.f32 %v1884, %v1905
        %v1908 = vadd.f32 %v1885, %v1906
        %v1909 = vsel %vm885, %v1907, 0.0
        %v1910 = vsel %vm886, %v1908, 0.0
        %v1911 = vadd.f32 %v1792, %v1909
        %v1912 = vadd.f32 %v1793, %v1910
        %v1913 = vld [vmem:[#allocation3] sm:$0xff]
        %v1914 = vld [vmem:[#allocation3 + $0x8] sm:$0xf]
        %1915 = vset.pattern.permute.xlu0 2
        %1916 = vperm.xlu0 %1915, %v1666
        %v1917 = vpop.permute.xlu0 %1916
        %v1921 = vcombine.high %v1913, %v1913
        %1922 = vrot.lane.b32.xlu0 %v1913, 32
        %v1923 = vpop.permute.xlu0 %1922
        %1924 = vrot.lane.b32.xlu0 %v1921, 32
        %v1925 = vpop.permute.xlu0 %1924
        %1926 = vrot.lane.b32.xlu0 %v1914, 32
        %v1927 = vpop.permute.xlu0 %1926
        %v1928 = vsel %vm925, %v1923, %v1925
        %v1929 = vsel %vm925, %v1925, %v1927
        %v1932 = vmul.f32 %v1917, %v1928
        %v1933 = vmul.f32 %v1917, %v1929
        %v1934 = vadd.f32 %v1932, 0.0
        %v1935 = vadd.f32 %v1933, 0.0
        %v1936 = vld [vmem:[#allocation3] sm:$0xff]
        %v1937 = vld [vmem:[#allocation3 + $0x8] sm:$0xf]
        %1938 = vset.pattern.permute.xlu0 7
        %1939 = vperm.xlu0 %1938, %v1666
        %v1940 = vpop.permute.xlu0 %1939
        %v1944 = vcombine.high %v1936, %v1936
        %1945 = vrot.lane.b32.xlu0 %v1936, 16
        %v1946 = vpop.permute.xlu0 %1945
        %1947 = vrot.lane.b32.xlu0 %v1944, 16
        %v1948 = vpop.permute.xlu0 %1947
        %1949 = vrot.lane.b32.xlu0 %v1937, 16
        %v1950 = vpop.permute.xlu0 %1949
        %v1951 = vsel %vm962, %v1946, %v1948
        %v1952 = vsel %vm962, %v1948, %v1950
        %v1955 = vmul.f32 %v1940, %v1951
        %v1956 = vmul.f32 %v1940, %v1952
        %v1957 = vadd.f32 %v1934, %v1955
        %v1958 = vadd.f32 %v1935, %v1956
        %v1959 = vld [vmem:[#allocation3 + $0x4] sm:$0xff]
        %1960 = vset.pattern.permute.xlu0 12
        %1961 = vperm.xlu0 %1960, %v1666
        %v1962 = vpop.permute.xlu0 %1961
        %v1965 = vcombine.high %v1959, %v1959
        %v1967 = vmul.f32 %v1962, %v1959
        %v1968 = vmul.f32 %v1962, %v1965
        %v1969 = vadd.f32 %v1957, %v1967
        %v1970 = vadd.f32 %v1958, %v1968
        %v1971 = vld [vmem:[#allocation3 + $0x4] sm:$0xff]
        %v1972 = vld [vmem:[#allocation3 + $0xc] sm:$0xf]
        %1973 = vset.pattern.permute.xlu0 17
        %1974 = vperm.xlu0 %1973, %v1666
        %v1975 = vpop.permute.xlu0 %1974
        %v1979 = vcombine.high %v1971, %v1971
        %1980 = vrot.lane.b32.xlu0 %v1971, 112
        %v1981 = vpop.permute.xlu0 %1980
        %1982 = vrot.lane.b32.xlu0 %v1979, 112
        %v1983 = vpop.permute.xlu0 %1982
        %1984 = vrot.lane.b32.xlu0 %v1972, 112
        %v1985 = vpop.permute.xlu0 %1984
        %v1986 = vsel %vm1019, %v1981, %v1983
        %v1987 = vsel %vm1019, %v1983, %v1985
        %v1990 = vmul.f32 %v1975, %v1986
        %v1991 = vmul.f32 %v1975, %v1987
        %v1992 = vadd.f32 %v1969, %v1990
        %v1993 = vadd.f32 %v1970, %v1991
        %v1994 = vld [vmem:[#allocation3 + $0x4] sm:$0xff]
        %v1995 = vld [vmem:[#allocation3 + $0xc] sm:$0xf]
        %1996 = vset.pattern.permute.xlu0 22
        %1997 = vperm.xlu0 %1996, %v1666
        %v1998 = vpop.permute.xlu0 %1997
        %v2002 = vcombine.high %v1994, %v1994
        %2003 = vrot.lane.b32.xlu0 %v1994, 96
        %v2004 = vpop.permute.xlu0 %2003
        %2005 = vrot.lane.b32.xlu0 %v2002, 96
        %v2006 = vpop.permute.xlu0 %2005
        %2007 = vrot.lane.b32.xlu0 %v1995, 96
        %v2008 = vpop.permute.xlu0 %2007
        %v2009 = vsel %vm1056, %v2004, %v2006
        %v2010 = vsel %vm1056, %v2006, %v2008
        %v2013 = vmul.f32 %v1998, %v2009
        %v2014 = vmul.f32 %v1998, %v2010
        %v2015 = vadd.f32 %v1992, %v2013
        %v2016 = vadd.f32 %v1993, %v2014
        %v2017 = vsel %vm1067, %v2015, 0.0
        %v2018 = vsel %vm1068, %v2016, 0.0
        %v2019 = vadd.f32 %v1911, %v2017
        %v2020 = vadd.f32 %v1912, %v2018
        %v2021 = vld [vmem:[#allocation3] sm:$0xff]
        %v2022 = vld [vmem:[#allocation3 + $0x8] sm:$0xf]
        %2023 = vset.pattern.permute.xlu0 3
        %2024 = vperm.xlu0 %2023, %v1666
        %v2025 = vpop.permute.xlu0 %2024
        %v2029 = vcombine.high %v2021, %v2021
        %2030 = vrot.lane.b32.xlu0 %v2021, 31
        %v2031 = vpop.permute.xlu0 %2030
        %2032 = vrot.lane.b32.xlu0 %v2029, 31
        %v2033 = vpop.permute.xlu0 %2032
        %2034 = vrot.lane.b32.xlu0 %v2022, 31
        %v2035 = vpop.permute.xlu0 %2034
        %v2036 = vsel %vm1109, %v2031, %v2033
        %v2037 = vsel %vm1109, %v2033, %v2035
        %v2040 = vmul.f32 %v2025, %v2036
        %v2041 = vmul.f32 %v2025, %v2037
        %v2042 = vadd.f32 %v2040, 0.0
        %v2043 = vadd.f32 %v2041, 0.0
        %v2044 = vld [vmem:[#allocation3] sm:$0xff]
        %v2045 = vld [vmem:[#allocation3 + $0x8] sm:$0xf]
        %2046 = vset.pattern.permute.xlu0 8
        %2047 = vperm.xlu0 %2046, %v1666
        %v2048 = vpop.permute.xlu0 %2047
        %v2052 = vcombine.high %v2044, %v2044
        %2053 = vrot.lane.b32.xlu0 %v2044, 15
        %v2054 = vpop.permute.xlu0 %2053
        %2055 = vrot.lane.b32.xlu0 %v2052, 15
        %v2056 = vpop.permute.xlu0 %2055
        %2057 = vrot.lane.b32.xlu0 %v2045, 15
        %v2058 = vpop.permute.xlu0 %2057
        %v2059 = vsel %vm1146, %v2054, %v2056
        %v2060 = vsel %vm1146, %v2056, %v2058
        %v2063 = vmul.f32 %v2048, %v2059
        %v2064 = vmul.f32 %v2048, %v2060
        %v2065 = vadd.f32 %v2042, %v2063
        %v2066 = vadd.f32 %v2043, %v2064
        %v2067 = vld [vmem:[#allocation3 + $0x4] sm:$0xff]
        %v2068 = vld [vmem:[#allocation3 + $0xc] sm:$0xf]
        %2069 = vset.pattern.permute.xlu0 13
        %2070 = vperm.xlu0 %2069, %v1666
        %v2071 = vpop.permute.xlu0 %2070
        %v2075 = vcombine.high %v2067, %v2067
        %2076 = vrot.lane.b32.xlu0 %v2067, 127
        %v2077 = vpop.permute.xlu0 %2076
        %2078 = vrot.lane.b32.xlu0 %v2075, 127
        %v2079 = vpop.permute.xlu0 %2078
        %2080 = vrot.lane.b32.xlu0 %v2068, 127
        %v2081 = vpop.permute.xlu0 %2080
        %v2082 = vsel %vm1183, %v2077, %v2079
        %v2083 = vsel %vm1183, %v2079, %v2081
        %v2086 = vmul.f32 %v2071, %v2082
        %v2087 = vmul.f32 %v2071, %v2083
        %v2088 = vadd.f32 %v2065, %v2086
        %v2089 = vadd.f32 %v2066, %v2087
        %v2090 = vld [vmem:[#allocation3 + $0x4] sm:$0xff]
        %v2091 = vld [vmem:[#allocation3 + $0xc] sm:$0xf]
        %2092 = vset.pattern.permute.xlu0 18
        %2093 = vperm.xlu0 %2092, %v1666
        %v2094 = vpop.permute.xlu0 %2093
        %v2098 = vcombine.high %v2090, %v2090
        %2099 = vrot.lane.b32.xlu0 %v2090, 111
        %v2100 = vpop.permute.xlu0 %2099
        %2101 = vrot.lane.b32.xlu0 %v2098, 111
        %v2102 = vpop.permute.xlu0 %2101
        %2103 = vrot.lane.b32.xlu0 %v2091, 111
        %v2104 = vpop.permute.xlu0 %2103
        %v2105 = vsel %vm1220, %v2100, %v2102
        %v2106 = vsel %vm1220, %v2102, %v2104
        %v2109 = vmul.f32 %v2094, %v2105
        %v2110 = vmul.f32 %v2094, %v2106
        %v2111 = vadd.f32 %v2088, %v2109
        %v2112 = vadd.f32 %v2089, %v2110
        %v2113 = vld [vmem:[#allocation3 + $0x4] sm:$0xff]
        %v2114 = vld [vmem:[#allocation3 + $0xc] sm:$0xf]
        %2115 = vset.pattern.permute.xlu0 23
        %2116 = vperm.xlu0 %2115, %v1666
        %v2117 = vpop.permute.xlu0 %2116
        %v2121 = vcombine.high %v2113, %v2113
        %2122 = vrot.lane.b32.xlu0 %v2113, 95
        %v2123 = vpop.permute.xlu0 %2122
        %2124 = vrot.lane.b32.xlu0 %v2121, 95
        %v2125 = vpop.permute.xlu0 %2124
        %2126 = vrot.lane.b32.xlu0 %v2114, 95
        %v2127 = vpop.permute.xlu0 %2126
        %v2128 = vsel %vm1257, %v2123, %v2125
        %v2129 = vsel %vm1257, %v2125, %v2127
        %v2132 = vmul.f32 %v2117, %v2128
        %v2133 = vmul.f32 %v2117, %v2129
        %v2134 = vadd.f32 %v2111, %v2132
        %v2135 = vadd.f32 %v2112, %v2133
        %v2136 = vsel %vm1268, %v2134, 0.0
        %v2137 = vsel %vm1269, %v2135, 0.0
        %v2138 = vadd.f32 %v2019, %v2136
        %v2139 = vadd.f32 %v2020, %v2137
        %v2140 = vld [vmem:[#allocation3] sm:$0xff]
        %v2141 = vld [vmem:[#allocation3 + $0x8] sm:$0xf]
        %2142 = vset.pattern.permute.xlu0 4
        %2143 = vperm.xlu0 %2142, %v1666
        %v2144 = vpop.permute.xlu0 %2143
        %v2148 = vcombine.high %v2140, %v2140
        %2149 = vrot.lane.b32.xlu0 %v2140, 30
        %v2150 = vpop.permute.xlu0 %2149
        %2151 = vrot.lane.b32.xlu0 %v2148, 30
        %v2152 = vpop.permute.xlu0 %2151
        %2153 = vrot.lane.b32.xlu0 %v2141, 30
        %v2154 = vpop.permute.xlu0 %2153
        %v2155 = vsel %vm1310, %v2150, %v2152
        %v2156 = vsel %vm1310, %v2152, %v2154
        %v2159 = vmul.f32 %v2144, %v2155
        %v2160 = vmul.f32 %v2144, %v2156
        %v2161 = vadd.f32 %v2159, 0.0
        %v2162 = vadd.f32 %v2160, 0.0
        %v2163 = vld [vmem:[#allocation3] sm:$0xff]
        %v2164 = vld [vmem:[#allocation3 + $0x8] sm:$0xf]
        %2165 = vset.pattern.permute.xlu0 9
        %2166 = vperm.xlu0 %2165, %v1666
        %v2167 = vpop.permute.xlu0 %2166
        %v2171 = vcombine.high %v2163, %v2163
        %2172 = vrot.lane.b32.xlu0 %v2163, 14
        %v2173 = vpop.permute.xlu0 %2172
        %2174 = vrot.lane.b32.xlu0 %v2171, 14
        %v2175 = vpop.permute.xlu0 %2174
        %2176 = vrot.lane.b32.xlu0 %v2164, 14
        %v2177 = vpop.permute.xlu0 %2176
        %v2178 = vsel %vm1347, %v2173, %v2175
        %v2179 = vsel %vm1347, %v2175, %v2177
        %v2182 = vmul.f32 %v2167, %v2178
        %v2183 = vmul.f32 %v2167, %v2179
        %v2184 = vadd.f32 %v2161, %v2182
        %v2185 = vadd.f32 %v2162, %v2183
        %v2186 = vld [vmem:[#allocation3 + $0x4] sm:$0xff]
        %v2187 = vld [vmem:[#allocation3 + $0xc] sm:$0xf]
        %2188 = vset.pattern.permute.xlu0 14
        %2189 = vperm.xlu0 %2188, %v1666
        %v2190 = vpop.permute.xlu0 %2189
        %v2194 = vcombine.high %v2186, %v2186
        %2195 = vrot.lane.b32.xlu0 %v2186, 126
        %v2196 = vpop.permute.xlu0 %2195
        %2197 = vrot.lane.b32.xlu0 %v2194, 126
        %v2198 = vpop.permute.xlu0 %2197
        %2199 = vrot.lane.b32.xlu0 %v2187, 126
        %v2200 = vpop.permute.xlu0 %2199
        %v2201 = vsel %vm1384, %v2196, %v2198
        %v2202 = vsel %vm1384, %v2198, %v2200
        %v2205 = vmul.f32 %v2190, %v2201
        %v2206 = vmul.f32 %v2190, %v2202
        %v2207 = vadd.f32 %v2184, %v2205
        %v2208 = vadd.f32 %v2185, %v2206
        %v2209 = vld [vmem:[#allocation3 + $0x4] sm:$0xff]
        %v2210 = vld [vmem:[#allocation3 + $0xc] sm:$0xf]
        %2211 = vset.pattern.permute.xlu0 19
        %2212 = vperm.xlu0 %2211, %v1666
        %v2213 = vpop.permute.xlu0 %2212
        %v2217 = vcombine.high %v2209, %v2209
        %2218 = vrot.lane.b32.xlu0 %v2209, 110
        %v2219 = vpop.permute.xlu0 %2218
        %2220 = vrot.lane.b32.xlu0 %v2217, 110
        %v2221 = vpop.permute.xlu0 %2220
        %2222 = vrot.lane.b32.xlu0 %v2210, 110
        %v2223 = vpop.permute.xlu0 %2222
        %v2224 = vsel %vm1421, %v2219, %v2221
        %v2225 = vsel %vm1421, %v2221, %v2223
        %v2228 = vmul.f32 %v2213, %v2224
        %v2229 = vmul.f32 %v2213, %v2225
        %v2230 = vadd.f32 %v2207, %v2228
        %v2231 = vadd.f32 %v2208, %v2229
        %v2232 = vld [vmem:[#allocation3 + $0x4] sm:$0xff]
        %v2233 = vld [vmem:[#allocation3 + $0xc] sm:$0xf]
        %2234 = vset.pattern.permute.xlu0 24
        %2235 = vperm.xlu0 %2234, %v1666
        %v2236 = vpop.permute.xlu0 %2235
        %v2240 = vcombine.high %v2232, %v2232
        %2241 = vrot.lane.b32.xlu0 %v2232, 94
        %v2242 = vpop.permute.xlu0 %2241
        %2243 = vrot.lane.b32.xlu0 %v2240, 94
        %v2244 = vpop.permute.xlu0 %2243
        %2245 = vrot.lane.b32.xlu0 %v2233, 94
        %v2246 = vpop.permute.xlu0 %2245
        %v2247 = vsel %vm1458, %v2242, %v2244
        %v2248 = vsel %vm1458, %v2244, %v2246
        %v2251 = vmul.f32 %v2236, %v2247
        %v2252 = vmul.f32 %v2236, %v2248
        %v2253 = vadd.f32 %v2230, %v2251
        %v2254 = vadd.f32 %v2231, %v2252
        %v2255 = vsel %vm1469, %v2253, 0.0
        %v2256 = vsel %vm1470, %v2254, 0.0
        %v2257 = vadd.f32 %v2138, %v2255
        %v2258 = vadd.f32 %v2139, %v2256
        %v2259 = vld [vmem:[%s8] sm:$0xf]
        %2261 = vset.pattern.permute.xlu0 0
        %2262 = vperm.xlu0 %2261, %v2259
        %v2263 = vpop.permute.xlu0 %2262
        %v2265 = vadd.f32 %v2257, %v2263
        %v2266 = vadd.f32 %v2258, %v2263
        %v2267 = vadd.f32 %v1664, %v349
        %v2268 = vadd.f32 %v1665, %v350
        %2269 = vst [vmem:[%s348] sm:$0xf] %v2267
        %2270 = vst [vmem:[%s348 + $0x8] sm:$0xf] %v2268
        %v2273 = vrot.slane %v349, 4
        %v2274 = vrot.slane %v350, 4
        %v2277 = vadd.f32 %v2265, %v2273
        %v2278 = vadd.f32 %v2266, %v2274
        %v2281 = vrot.slane %v2277, 4
        %v2282 = vrot.slane %v2278, 4
        %2285 = vst [vmem:[%s348] sm:$0xf0] %v2281
        %2286 = vst [vmem:[%s348 + $0x8] sm:$0xf0] %v2282
        %s2287 = sand.u32 %s228, 1
        %s2288 = scalar_lea.sflag [#allocation6], %s2287
        %s2289 = sand.u32 %s228, 1
        %s2290 = smul.addr %s2289, 16
        %s2291 = scalar_lea.vmem [#allocation7], %s2290
        // Predicated region
        $region61: #{tpu_custom_call.1} parent=55 // pred_check
          %p2292 = pneg %p238
        $region62: #{tpu_custom_call.1} parent=55 // pred_check_branch
          %2294 = sbr.rel (%p2292) target = $region64
        $region63: #{tpu_custom_call.1} parent=55 // pred_region
          %s2296 = ssub.s32 256, 256
          %2297 = vsyncadd %s2288, %s2296
          %s2298 = smul.addr %s26, 2
          %s2299 = smul.addr %s2298, 128
          %s2300 = scalar_lea.hbm %s9, %s2299
          %s2302 = sshll.u32 %s2291, 4
          %s2303 = int_to_ptr.vmem [resolvable:$true] %s2302
          %2305 = dma.vmem_to_hbm [thread:$0]  %s2303, 256, %s2300, %s2288
        $region64: #{tpu_custom_call.1} parent=55 // pred_fallthru
          _
      $region56: #{tpu_custom_call.1} parent=5 // pred_fallthru
        _
      %p2306 = scmp.le.s32.totalorder 2, %s21
      // Predicated region
      $region65: #{tpu_custom_call.1} parent=5 // pred_check
        %p2307 = pneg %p2306
      $region66: #{tpu_custom_call.1} parent=5 // pred_check_branch
        %2309 = sbr.rel (%p2307) target = $region68
      $region67: #{tpu_custom_call.1} parent=5 // pred_region
        %s2310 = ssub.s32 %s21, 2
        // Predicated region
        $region69: #{tpu_custom_call.1} parent=67 // pred_check
          %p2311 = pneg %p244
        $region70: #{tpu_custom_call.1} parent=67 // pred_check_branch
          %2313 = sbr.rel (%p2311) target = $region72
        $region71: #{tpu_custom_call.1} parent=67 // pred_region
          %s2314 = sand.u32 %s229, 1
          %s2315 = scalar_lea.sflag [#allocation6], %s2314
          %s2316 = sand.u32 %s229, 1
          %s2317 = smul.addr %s2316, 16
          %s2318 = scalar_lea.vmem [#allocation7], %s2317
          %2319 = dma.done %s2315, 256
        $region72: #{tpu_custom_call.1} parent=67 // pred_fallthru
          _
      $region68: #{tpu_custom_call.1} parent=5 // pred_fallthru
        _
    $region6: #{tpu_custom_call.1} parent=1 // loop_footer
      %s25 = sadd.s32 1, %s21
    $region7: #{tpu_custom_call.1} parent=1 // loop_footer_branch
      %20 = sbr.rel target = $region3
    $region8: #{tpu_custom_call.1} parent=1 // loop_exit
      _
    %2320 = vsyncpa [#allocation5], 1
    %s2321 = scalar_lea.sflag [#allocation5], 1
    %2322 = vsyncpa %s2321, 1
    %2323 = vsyncpa [#allocation6], 1
    %s2324 = scalar_lea.sflag [#allocation6], 1
    %2325 = vsyncpa %s2324, 1

</llo_original>
